<compile_context>
chip_gen: v6e
topology: v6e:2x2x1
jax: 0.10.0
libtpu: 0.0.40
codegen_flags: <defaults>
</compile_context>

<pallas_src>
import functools

import jax
import jax.numpy as jnp
from jax.experimental import pallas as pl
from jax.experimental.pallas import tpu as pltpu

LANE = 128     # TPU vreg lane width
SUBLANE = 8    # f32 sublane count


# ---------------------------------------------------------------------------
# small padding helpers (wrapper-side glue)
# ---------------------------------------------------------------------------
def _round_up(x, m):
    return (x + m - 1) // m * m


def _pad_axis_to(x, axis, target):
    pad = target - x.shape[axis]
    if pad <= 0:
        return x
    widths = [(0, 0)] * x.ndim
    widths[axis] = (0, pad)
    return jnp.pad(x, widths)


def _pad_axis_to_multiple(x, axis, mult):
    return _pad_axis_to(x, axis, _round_up(x.shape[axis], mult))


# ---------------------------------------------------------------------------
# Pallas kernel: fused chain   h_{s+1} = act_s(h_s @ W_s + b_s)
#   x tile (tm, K0) bf16; weights bf16; biases f32.  Matmuls accumulate in f32 on
#   the MXU, epilogue (bias + SiLU) stays in f32 on the VPU/EUP.  Intermediates
#   live entirely in VMEM/vregs — no HBM round trip between fused stages.
# ---------------------------------------------------------------------------
def _fused_chain_kernel(*refs, acts):
    x_ref, o_ref = refs[0], refs[-1]
    wb = refs[1:-1]
    h = x_ref[...]                                        # bf16 (tm, K0)
    y = None
    for s, apply_silu in enumerate(acts):
        w = wb[2 * s][...]                                # bf16 (K_s, N_s)
        b = wb[2 * s + 1][...]                            # f32  (1, N_s)
        y = jnp.dot(h, w, preferred_element_type=jnp.float32) + b
        if apply_silu:
            y = y * jax.nn.sigmoid(y)                     # SiLU in f32
        h = y.astype(jnp.bfloat16)                        # operand for next MXU stage
    o_ref[...] = y.astype(o_ref.dtype)


def fused_chain(x, stages, *, tm_max=256, out_dtype=jnp.float32):
    """out = chained act(x @ W + b) stages in ONE pallas_call, tiled over rows.

    x: (M, K0); stages: list of (W (K,N), b (N,), apply_silu).  Lane dims of the
    weights are pre-padded to multiples of 128 so loads/stores are lane-dense.
    """
    M, K0 = x.shape
    Mp = _round_up(M, SUBLANE)
    tm = min(tm_max, Mp)
    Mp = _round_up(Mp, tm)
    xp = _pad_axis_to(x, 0, Mp).astype(jnp.bfloat16)      # bf16 halves HBM->VMEM bytes

    acts = tuple(bool(a) for (_, _, a) in stages)
    n_out = stages[-1][0].shape[1]

    in_specs = [pl.BlockSpec((tm, K0), lambda i: (i, 0))]
    operands = [xp]
    flops, trans = 0, 0
    bytes_accessed = xp.size * 2 + Mp * n_out * jnp.dtype(out_dtype).itemsize
    k_cur = K0
    for (w, b, apply_silu) in stages:
        kw, nw = w.shape
        assert kw == k_cur, (kw, k_cur)
        in_specs.append(pl.BlockSpec((kw, nw), lambda i: (0, 0)))   # full weight resident
        in_specs.append(pl.BlockSpec((1, nw), lambda i: (0, 0)))    # bias row
        operands.append(w.astype(jnp.bfloat16))
        operands.append(b.reshape(1, nw).astype(jnp.float32))
        flops += 2 * Mp * kw * nw
        if apply_silu:
            trans += Mp * nw
        bytes_accessed += kw * nw * 2 + nw * 4
        k_cur = nw

    out = pl.pallas_call(
        functools.partial(_fused_chain_kernel, acts=acts),
        out_shape=jax.ShapeDtypeStruct((Mp, n_out), out_dtype),
        grid=(Mp // tm,),
        in_specs=in_specs,
        out_specs=pl.BlockSpec((tm, n_out), lambda i: (i, 0)),
        compiler_params=pltpu.CompilerParams(
            dimension_semantics=("parallel",),            # independent M tiles -> megacore
            vmem_limit_bytes=32 * 1024 * 1024,            # fits every generation (v7x: 64 MiB phys)
        ),
        cost_estimate=pl.CostEstimate(
            flops=flops, transcendentals=trans, bytes_accessed=bytes_accessed),
    )(*operands)
    return out[:M]


# ---------------------------------------------------------------------------
# im2col glue (pure JAX: pad + static strided slices, no heavy compute)
# ---------------------------------------------------------------------------
def im2col_nhwc(x_nhwc, ksize, stride, pad):
    B, H, W, C = x_nhwc.shape
    xp = jnp.pad(x_nhwc, ((0, 0), (pad, pad), (pad, pad), (0, 0)))
    Ho = (H + 2 * pad - ksize) // stride + 1
    Wo = (W + 2 * pad - ksize) // stride + 1
    patches = []
    for kh in range(ksize):
        for kw in range(ksize):
            patches.append(
                xp[:, kh: kh + stride * Ho: stride, kw: kw + stride * Wo: stride, :])
    p = jnp.stack(patches, axis=3)                        # (B, Ho, Wo, k*k, C) -> rows (kh, kw, c)
    return p.reshape(B * Ho * Wo, ksize * ksize * C), Ho, Wo


# ---------------------------------------------------------------------------
# Parameters: raw PyTorch-layout init + packing into padded, matmul-ready form
# ---------------------------------------------------------------------------
def init_params(key, in_channels, cnn_dim, out_channels):
    ks = jax.random.split(key, 8)
    d2 = 2 * cnn_dim
    mlp_in = d2  # self.cnn.mlp_in_channels

    def kaiming(k, shape, fan_in):
        return (jax.random.normal(k, shape, jnp.float32) / jnp.sqrt(fan_in)).astype(jnp.float32)

    return {
        # Cnn
        "conv1_w": kaiming(ks[0], (cnn_dim, in_channels, 3, 3), in_channels * 9),
        "conv1_b": kaiming(ks[1], (cnn_dim,), in_channels * 9),
        "conv2_w": kaiming(ks[2], (d2, cnn_dim, 3, 3), cnn_dim * 9),
        "conv2_b": kaiming(ks[3], (d2,), cnn_dim * 9),
        # MLP: Linear(mlp_in, out), SiLU, Linear(out, out)
        "fc1_w": kaiming(ks[4], (mlp_in, out_channels), mlp_in),
        "fc1_b": kaiming(ks[5], (out_channels,), mlp_in),
        "fc2_w": kaiming(ks[6], (out_channels, out_channels), out_channels),
        "fc2_b": kaiming(ks[7], (out_channels,), out_channels),
    }


def prepare_kernel_params(params):
    """Pack raw params into lane-padded, bf16, matmul-ready kernel params.

    Conv weights OIHW -> (KH*KW*I, O) matching the im2col row order (kh, kw, c).
    Output (lane) dims are zero-padded to multiples of 128, contraction (sublane)
    dims to multiples of 8.  Padding is exact through the whole network: padded
    bias entries are 0, silu(0) = 0, and padded weight rows/cols are 0.
    """
    kp = {}

    def pack_conv(w_oihw, b, pad_in_to=None):
        w = jnp.transpose(w_oihw, (2, 3, 1, 0))           # (KH, KW, I, O)
        if pad_in_to is not None:
            w = _pad_axis_to(w, 2, pad_in_to)             # pad input channels BEFORE flatten
        KH, KW, I, O = w.shape
        w = w.reshape(KH * KW * I, O)
        w = _pad_axis_to_multiple(w, 0, SUBLANE)
        w = _pad_axis_to_multiple(w, 1, LANE)
        b = _pad_axis_to_multiple(b.reshape(1, -1), 1, LANE)
        return w.astype(jnp.bfloat16), b.astype(jnp.float32)

    def pack_fc(w, b, pad_in_to):
        w = _pad_axis_to(w, 0, pad_in_to)
        w = _pad_axis_to_multiple(w, 1, LANE)
        b = _pad_axis_to_multiple(b.reshape(1, -1), 1, LANE)
        return w.astype(jnp.bfloat16), b.astype(jnp.float32)

    c1p = _round_up(params["conv1_w"].shape[0], LANE)     # padded cnn_dim
    kp["conv1_w"], kp["conv1_b"] = pack_conv(params["conv1_w"], params["conv1_b"])
    kp["conv2_w"], kp["conv2_b"] = pack_conv(
        params["conv2_w"], params["conv2_b"], pad_in_to=c1p)
    c2p = kp["conv2_w"].shape[1]                          # padded 2*cnn_dim
    kp["fc1_w"], kp["fc1_b"] = pack_fc(params["fc1_w"], params["fc1_b"], pad_in_to=c2p)
    d1p = kp["fc1_w"].shape[1]
    kp["fc2_w"], kp["fc2_b"] = pack_fc(params["fc2_w"], params["fc2_b"], pad_in_to=d1p)
    return kp


# ---------------------------------------------------------------------------
# Forward passes
# ---------------------------------------------------------------------------
def cnn_embedder_forward(kparams, x_nchw, *, out_channels):
    """x: (b, c, n, n) NCHW (PyTorch convention) -> out: (b, seq, out_channels)."""
    x = jnp.transpose(x_nchw, (0, 2, 3, 1)).astype(jnp.float32)   # NCHW -> NHWC
    B = x.shape[0]

    # --- conv1 + SiLU:  im2col -> single Pallas GEMM (lane-padded channels) ---
    cols1, H1, W1 = im2col_nhwc(x, 3, 2, 1)
    cols1 = _pad_axis_to(cols1, 1, kparams["conv1_w"].shape[0])   # K: 9*C -> sublane-aligned
    h1 = fused_chain(cols1,
                     [(kparams["conv1_w"], kparams["conv1_b"], True)],
                     out_dtype=jnp.bfloat16)                      # (B*H1*W1, 128) bf16
    h1 = h1.reshape(B, H1, W1, -1)

    # --- conv2 + SiLU + fc1 + SiLU + fc2: ONE fused Pallas kernel ---
    cols2, H2, W2 = im2col_nhwc(h1, 3, 2, 1)                      # (B*H2*W2, 9*128)
    out = fused_chain(
        cols2,
        [(kparams["conv2_w"], kparams["conv2_b"], True),
         (kparams["fc1_w"], kparams["fc1_b"], True),
         (kparams["fc2_w"], kparams["fc2_b"], False)],
        out_dtype=jnp.float32)                                    # (B*H2*W2, 128)
    return out[:, :out_channels].reshape(B, H2 * W2, out_channels)


def reference_forward(params, x_nchw):
    """Pure-JAX f32 reference (lax conv + jnp) mirroring the PyTorch module."""
    x = jnp.transpose(x_nchw, (0, 2, 3, 1))

    def conv(x, w_oihw, b, stride):
        w = jnp.transpose(w_oihw, (2, 3, 1, 0))  # HWIO
        y = jax.lax.conv_general_dilated(
            x, w, window_strides=(stride, stride), padding=((1, 1), (1, 1)),
            dimension_numbers=("NHWC", "HWIO", "NHWC"))
        return jax.nn.silu(y + b)

    x = conv(x, params["conv1_w"], params["conv1_b"], 2)
    x = conv(x, params["conv2_w"], params["conv2_b"], 2)
    B, Ho, Wo, D2 = x.shape
    x = x.reshape(B, Ho * Wo, D2)
    x = jax.nn.silu(x @ params["fc1_w"] + params["fc1_b"])
    x = x @ params["fc2_w"] + params["fc2_b"]
    return x


if __name__ == "__main__":
    B, C, N = 2, 4, 16          # input (b, c, n, n)
    CNN_DIM, OUT_CHANNELS = 8, 32

    key = jax.random.PRNGKey(0)
    kp_, kx = jax.random.split(key)
    params = init_params(kp_, C, CNN_DIM, OUT_CHANNELS)
    kparams = prepare_kernel_params(params)
    x = jax.random.normal(kx, (B, C, N, N), jnp.float32)

    fwd = jax.jit(functools.partial(cnn_embedder_forward, out_channels=OUT_CHANNELS))
    out = jax.block_until_ready(fwd(kparams, x))

    ref = reference_forward(params, x)
    assert out.shape == (B, (N // 4) * (N // 4), OUT_CHANNELS), out.shape
    max_err = float(jnp.max(jnp.abs(out - ref)))
    # bf16 MXU operands (f32 accumulation) vs. an all-f32 reference -> loosened tolerance.
    assert jnp.allclose(out, ref, rtol=5e-2, atol=5e-2), max_err

    print("KERNEL_OK")
</pallas_src>

<mosaic_0001>
module attributes {stable_mosaic.version = 11 : i64} {
  func.func @_fused_chain_kernel(%arg0: i32, %arg1: memref<128x40xbf16, #tpu.memory_space<vmem>>, %arg2: memref<40x128xbf16, #tpu.memory_space<vmem>>, %arg3: memref<1x128xf32, #tpu.memory_space<vmem>>, %arg4: memref<128x128xbf16, #tpu.memory_space<vmem>>) attributes {dimension_semantics = [#tpu.dimension_semantics<parallel>], iteration_bounds = array<i64: 1>, scalar_prefetch = 0 : i64, scratch_operands = 0 : i64, tpu.core_type = #tpu.core_type<tc>, window_params = [{transform_indices = @transform_0, window_bounds = array<i64: 128, 40>}, {pipeline_mode = #tpu.pipeline_mode<synchronous>, transform_indices = @transform_1, window_bounds = array<i64: 40, 128>}, {pipeline_mode = #tpu.pipeline_mode<synchronous>, transform_indices = @transform_2, window_bounds = array<i64: 1, 128>}, {transform_indices = @transform_3, window_bounds = array<i64: 128, 128>}]} {
    %c0 = arith.constant 0 : index
    %c0_0 = arith.constant 0 : index
    %0 = vector.load %arg1[%c0, %c0_0] : memref<128x40xbf16, #tpu.memory_space<vmem>>, vector<128x40xbf16>
    %c0_1 = arith.constant 0 : index
    %c0_2 = arith.constant 0 : index
    %1 = vector.load %arg2[%c0_1, %c0_2] : memref<40x128xbf16, #tpu.memory_space<vmem>>, vector<40x128xbf16>
    %c0_3 = arith.constant 0 : index
    %c0_4 = arith.constant 0 : index
    %2 = vector.load %arg3[%c0_3, %c0_4] : memref<1x128xf32, #tpu.memory_space<vmem>>, vector<1x128xf32>
    %cst = arith.constant dense<0.000000e+00> : vector<128x128xf32>
    %3 = tpu.matmul %0, %1, %cst {dimension_numbers = #tpu.dot_dimension_numbers<[1], [0], [0], [1], [0, 0, 1, 1], [], []>} : vector<128x40xbf16>, vector<40x128xbf16>, vector<128x128xf32> -> vector<128x128xf32>
    %4 = vector.broadcast %2 : vector<1x128xf32> to vector<128x128xf32>
    %5 = arith.addf %3, %4 : vector<128x128xf32>
    %6 = arith.negf %5 : vector<128x128xf32>
    %7 = math.exp %6 : vector<128x128xf32>
    %cst_5 = arith.constant 1.000000e+00 : f32
    %8 = vector.broadcast %cst_5 : f32 to vector<128x128xf32>
    %9 = arith.addf %8, %7 : vector<128x128xf32>
    %10 = arith.divf %8, %9 : vector<128x128xf32>
    %11 = arith.mulf %5, %10 : vector<128x128xf32>
    %12 = arith.truncf %11 : vector<128x128xf32> to vector<128x128xbf16>
    %c0_6 = arith.constant 0 : index
    %c0_7 = arith.constant 0 : index
    %13 = vector.load %arg4[%c0_6, %c0_7] : memref<128x128xbf16, #tpu.memory_space<vmem>>, vector<128x128xbf16>
    tpu.vector_store %arg4[%c0_6, %c0_7], %12 {strides = array<i32>} : memref<128x128xbf16, #tpu.memory_space<vmem>>, vector<128x128xbf16>,
    return
  }
  func.func @transform_0(%arg0: i32) -> (i32, i32) {
    %c0_i32 = arith.constant 0 : i32
    %c0_i32_0 = arith.constant 0 : i32
    return %arg0, %c0_i32 : i32, i32
  }
  func.func @transform_1(%arg0: i32) -> (i32, i32) {
    %c0_i32 = arith.constant 0 : i32
    %c0_i32_0 = arith.constant 0 : i32
    %c0_i32_1 = arith.constant 0 : i32
    return %c0_i32, %c0_i32_0 : i32, i32
  }
  func.func @transform_2(%arg0: i32) -> (i32, i32) {
    %c0_i32 = arith.constant 0 : i32
    %c0_i32_0 = arith.constant 0 : i32
    %c0_i32_1 = arith.constant 0 : i32
    return %c0_i32, %c0_i32_0 : i32, i32
  }
  func.func @transform_3(%arg0: i32) -> (i32, i32) {
    %c0_i32 = arith.constant 0 : i32
    %c0_i32_0 = arith.constant 0 : i32
    return %arg0, %c0_i32 : i32, i32
  }
}

module attributes {stable_mosaic.version = 11 : i64} {
  func.func @_fused_chain_kernel(%arg0: i32, %arg1: memref<32x1152xbf16, #tpu.memory_space<vmem>>, %arg2: memref<1152x128xbf16, #tpu.memory_space<vmem>>, %arg3: memref<1x128xf32, #tpu.memory_space<vmem>>, %arg4: memref<128x128xbf16, #tpu.memory_space<vmem>>, %arg5: memref<1x128xf32, #tpu.memory_space<vmem>>, %arg6: memref<128x128xbf16, #tpu.memory_space<vmem>>, %arg7: memref<1x128xf32, #tpu.memory_space<vmem>>, %arg8: memref<32x128xf32, #tpu.memory_space<vmem>>) attributes {dimension_semantics = [#tpu.dimension_semantics<parallel>], iteration_bounds = array<i64: 1>, scalar_prefetch = 0 : i64, scratch_operands = 0 : i64, tpu.core_type = #tpu.core_type<tc>, window_params = [{transform_indices = @transform_0, window_bounds = array<i64: 32, 1152>}, {pipeline_mode = #tpu.pipeline_mode<synchronous>, transform_indices = @transform_1, window_bounds = array<i64: 1152, 128>}, {pipeline_mode = #tpu.pipeline_mode<synchronous>, transform_indices = @transform_2, window_bounds = array<i64: 1, 128>}, {pipeline_mode = #tpu.pipeline_mode<synchronous>, transform_indices = @transform_3, window_bounds = array<i64: 128, 128>}, {pipeline_mode = #tpu.pipeline_mode<synchronous>, transform_indices = @transform_4, window_bounds = array<i64: 1, 128>}, {pipeline_mode = #tpu.pipeline_mode<synchronous>, transform_indices = @transform_5, window_bounds = array<i64: 128, 128>}, {pipeline_mode = #tpu.pipeline_mode<synchronous>, transform_indices = @transform_6, window_bounds = array<i64: 1, 128>}, {transform_indices = @transform_7, window_bounds = array<i64: 32, 128>}]} {
    %c0 = arith.constant 0 : index
    %c0_0 = arith.constant 0 : index
    %0 = vector.load %arg1[%c0, %c0_0] : memref<32x1152xbf16, #tpu.memory_space<vmem>>, vector<32x1152xbf16>
    %c0_1 = arith.constant 0 : index
    %c0_2 = arith.constant 0 : index
    %1 = vector.load %arg2[%c0_1, %c0_2] : memref<1152x128xbf16, #tpu.memory_space<vmem>>, vector<1152x128xbf16>
    %c0_3 = arith.constant 0 : index
    %c0_4 = arith.constant 0 : index
    %2 = vector.load %arg3[%c0_3, %c0_4] : memref<1x128xf32, #tpu.memory_space<vmem>>, vector<1x128xf32>
    %cst = arith.constant dense<0.000000e+00> : vector<32x128xf32>
    %3 = tpu.matmul %0, %1, %cst {dimension_numbers = #tpu.dot_dimension_numbers<[1], [0], [0], [1], [0, 0, 1, 1], [], []>} : vector<32x1152xbf16>, vector<1152x128xbf16>, vector<32x128xf32> -> vector<32x128xf32>
    %4 = vector.broadcast %2 : vector<1x128xf32> to vector<32x128xf32>
    %5 = arith.addf %3, %4 : vector<32x128xf32>
    %6 = arith.negf %5 : vector<32x128xf32>
    %7 = math.exp %6 : vector<32x128xf32>
    %cst_5 = arith.constant 1.000000e+00 : f32
    %8 = vector.broadcast %cst_5 : f32 to vector<32x128xf32>
    %9 = arith.addf %8, %7 : vector<32x128xf32>
    %10 = arith.divf %8, %9 : vector<32x128xf32>
    %11 = arith.mulf %5, %10 : vector<32x128xf32>
    %12 = arith.truncf %11 : vector<32x128xf32> to vector<32x128xbf16>
    %c0_6 = arith.constant 0 : index
    %c0_7 = arith.constant 0 : index
    %13 = vector.load %arg4[%c0_6, %c0_7] : memref<128x128xbf16, #tpu.memory_space<vmem>>, vector<128x128xbf16>
    %c0_8 = arith.constant 0 : index
    %c0_9 = arith.constant 0 : index
    %14 = vector.load %arg5[%c0_8, %c0_9] : memref<1x128xf32, #tpu.memory_space<vmem>>, vector<1x128xf32>
    %cst_10 = arith.constant dense<0.000000e+00> : vector<32x128xf32>
    %15 = tpu.matmul %12, %13, %cst_10 {dimension_numbers = #tpu.dot_dimension_numbers<[1], [0], [0], [1], [0, 0, 1, 1], [], []>} : vector<32x128xbf16>, vector<128x128xbf16>, vector<32x128xf32> -> vector<32x128xf32>
    %16 = vector.broadcast %14 : vector<1x128xf32> to vector<32x128xf32>
    %17 = arith.addf %15, %16 : vector<32x128xf32>
    %18 = arith.negf %17 : vector<32x128xf32>
    %19 = math.exp %18 : vector<32x128xf32>
    %cst_11 = arith.constant 1.000000e+00 : f32
    %20 = vector.broadcast %cst_11 : f32 to vector<32x128xf32>
    %21 = arith.addf %20, %19 : vector<32x128xf32>
    %22 = arith.divf %20, %21 : vector<32x128xf32>
    %23 = arith.mulf %17, %22 : vector<32x128xf32>
    %24 = arith.truncf %23 : vector<32x128xf32> to vector<32x128xbf16>
    %c0_12 = arith.constant 0 : index
    %c0_13 = arith.constant 0 : index
    %25 = vector.load %arg6[%c0_12, %c0_13] : memref<128x128xbf16, #tpu.memory_space<vmem>>, vector<128x128xbf16>
    %c0_14 = arith.constant 0 : index
    %c0_15 = arith.constant 0 : index
    %26 = vector.load %arg7[%c0_14, %c0_15] : memref<1x128xf32, #tpu.memory_space<vmem>>, vector<1x128xf32>
    %cst_16 = arith.constant dense<0.000000e+00> : vector<32x128xf32>
    %27 = tpu.matmul %24, %25, %cst_16 {dimension_numbers = #tpu.dot_dimension_numbers<[1], [0], [0], [1], [0, 0, 1, 1], [], []>} : vector<32x128xbf16>, vector<128x128xbf16>, vector<32x128xf32> -> vector<32x128xf32>
    %28 = vector.broadcast %26 : vector<1x128xf32> to vector<32x128xf32>
    %29 = arith.addf %27, %28 : vector<32x128xf32>
    %c0_17 = arith.constant 0 : index
    %c0_18 = arith.constant 0 : index
    %30 = vector.load %arg8[%c0_17, %c0_18] : memref<32x128xf32, #tpu.memory_space<vmem>>, vector<32x128xf32>
    tpu.vector_store %arg8[%c0_17, %c0_18], %29 {strides = array<i32>} : memref<32x128xf32, #tpu.memory_space<vmem>>, vector<32x128xf32>,
    return
  }
  func.func @transform_0(%arg0: i32) -> (i32, i32) {
    %c0_i32 = arith.constant 0 : i32
    %c0_i32_0 = arith.constant 0 : i32
    return %arg0, %c0_i32 : i32, i32
  }
  func.func @transform_1(%arg0: i32) -> (i32, i32) {
    %c0_i32 = arith.constant 0 : i32
    %c0_i32_0 = arith.constant 0 : i32
    %c0_i32_1 = arith.constant 0 : i32
    return %c0_i32, %c0_i32_0 : i32, i32
  }
  func.func @transform_2(%arg0: i32) -> (i32, i32) {
    %c0_i32 = arith.constant 0 : i32
    %c0_i32_0 = arith.constant 0 : i32
    %c0_i32_1 = arith.constant 0 : i32
    return %c0_i32, %c0_i32_0 : i32, i32
  }
  func.func @transform_3(%arg0: i32) -> (i32, i32) {
    %c0_i32 = arith.constant 0 : i32
    %c0_i32_0 = arith.constant 0 : i32
    %c0_i32_1 = arith.constant 0 : i32
    return %c0_i32, %c0_i32_0 : i32, i32
  }
  func.func @transform_4(%arg0: i32) -> (i32, i32) {
    %c0_i32 = arith.constant 0 : i32
    %c0_i32_0 = arith.constant 0 : i32
    %c0_i32_1 = arith.constant 0 : i32
    return %c0_i32, %c0_i32_0 : i32, i32
  }
  func.func @transform_5(%arg0: i32) -> (i32, i32) {
    %c0_i32 = arith.constant 0 : i32
    %c0_i32_0 = arith.constant 0 : i32
    %c0_i32_1 = arith.constant 0 : i32
    return %c0_i32, %c0_i32_0 : i32, i32
  }
  func.func @transform_6(%arg0: i32) -> (i32, i32) {
    %c0_i32 = arith.constant 0 : i32
    %c0_i32_0 = arith.constant 0 : i32
    %c0_i32_1 = arith.constant 0 : i32
    return %c0_i32, %c0_i32_0 : i32, i32
  }
  func.func @transform_7(%arg0: i32) -> (i32, i32) {
    %c0_i32 = arith.constant 0 : i32
    %c0_i32_0 = arith.constant 0 : i32
    return %arg0, %c0_i32 : i32, i32
  }
}

</mosaic_0001>

<llo_original>
// kernel: cnn_embedder_forward.2
$region0: #{cnn_embedder_forward.2}
  #allocation0 [shape = 'u32[]', space=smem, size = 0x4, offset = 0x4, fixed_abs, tag = 'smem constant byte address 0x4 - core index']
  #allocation1 [shape = 'u32[144,128]{1,0:T(1,128)}', space=vmem, size = 0x12000, scoped, tag = 'internal scratch']
  %s0 = inlined_call_operand.vmem [shape: bf16[128,40], index: 0, kind: input, shape index: {}]
  %s1 = inlined_call_operand.vmem [shape: bf16[40,128], index: 1, kind: input, shape index: {}]
  %s2 = inlined_call_operand.vmem [shape: f32[1,128], index: 2, kind: input, shape index: {}]
  %s3 = inlined_call_operand.vmem [shape: bf16[128,128], index: 3, kind: output, shape index: {}]
  %s4 = sld [smem:[#allocation0]]
  $region22: #{cnn_embedder_forward.2} parent=0
    _
  %s6 = ssub.s32 1, %s4
  %s7 = scalar_select 0, %s6, %s4
  // Predicated region
  $region2: #{cnn_embedder_forward.2} parent=0 // pred_check
    _
  $region3: #{cnn_embedder_forward.2} parent=0 // pred_check_branch
    %9 = sbr.rel (0) target = $region5
  $region4: #{cnn_embedder_forward.2} parent=0 // pred_region
    _
  $region5: #{cnn_embedder_forward.2} parent=0 // pred_fallthru
    _
  // Predicated region
  $region6: #{cnn_embedder_forward.2} parent=0 // pred_check
    _
  $region7: #{cnn_embedder_forward.2} parent=0 // pred_check_branch
    %11 = sbr.rel (0) target = $region9
  $region8: #{cnn_embedder_forward.2} parent=0 // pred_region
    _
  $region9: #{cnn_embedder_forward.2} parent=0 // pred_fallthru
    _
  // Predicated region
  $region10: #{cnn_embedder_forward.2} parent=0 // pred_check
    _
  $region11: #{cnn_embedder_forward.2} parent=0 // pred_check_branch
    %13 = sbr.rel (0) target = $region13
  $region12: #{cnn_embedder_forward.2} parent=0 // pred_region
    _
  $region13: #{cnn_embedder_forward.2} parent=0 // pred_fallthru
    _
  %v15 = vld [vmem:[%s0] sm:$0xf]
  %v16 = vld [vmem:[%s0 + $0x4] sm:$0xf]
  %v17 = vld [vmem:[%s0 + $0x8] sm:$0xf]
  %v18 = vld [vmem:[%s0 + $0xc] sm:$0xf]
  %v19 = vld [vmem:[%s0 + $0x10] sm:$0xf]
  %v20 = vld [vmem:[%s0 + $0x14] sm:$0xf]
  %v21 = vld [vmem:[%s0 + $0x18] sm:$0xf]
  %v22 = vld [vmem:[%s0 + $0x1c] sm:$0xf]
  %v23 = vld [vmem:[%s0 + $0x20] sm:$0xf]
  %v24 = vld [vmem:[%s0 + $0x24] sm:$0xf]
  %v25 = vld [vmem:[%s0 + $0x28] sm:$0xf]
  %v26 = vld [vmem:[%s0 + $0x2c] sm:$0xf]
  %v27 = vld [vmem:[%s0 + $0x30] sm:$0xf]
  %v28 = vld [vmem:[%s0 + $0x34] sm:$0xf]
  %v29 = vld [vmem:[%s0 + $0x38] sm:$0xf]
  %v30 = vld [vmem:[%s0 + $0x3c] sm:$0xf]
  %v31 = vld [vmem:[%s1] sm:$0xf]
  %v32 = vld [vmem:[%s1 + $0x4] sm:$0xf]
  %v33 = vld [vmem:[%s1 + $0x8] sm:$0xf]
  %v34 = vld [vmem:[%s1 + $0xc] sm:$0xf]
  %v35 = vld [vmem:[%s1 + $0x10] sm:$0xf]
  %v36 = vld [vmem:[%s2] sm:$0x1]
  %v38 = vlaneseq
  %v39 = vshrl.u32 %v38, 7
  %v40 = vsub.s32 0, %v39
  %v41 = vrot.slane %v36, %v40
  %v59 = vunpack.c.l.b16 %v15
  %v60 = vunpack.c.l.b16 %v16
  %v61 = vunpack.c.l.b16 %v17
  %v62 = vunpack.c.l.b16 %v18
  %v63 = vunpack.c.l.b16 %v19
  %v64 = vunpack.c.l.b16 %v20
  %v65 = vunpack.c.l.b16 %v21
  %v66 = vunpack.c.l.b16 %v22
  %v67 = vunpack.c.l.b16 %v23
  %v68 = vunpack.c.l.b16 %v24
  %v69 = vunpack.c.l.b16 %v25
  %v70 = vunpack.c.l.b16 %v26
  %v71 = vunpack.c.l.b16 %v27
  %v72 = vunpack.c.l.b16 %v28
  %v73 = vunpack.c.l.b16 %v29
  %v74 = vunpack.c.l.b16 %v30
  %v75 = vpack.c.b16 %v60, %v59
  %v76 = vpack.c.b16 %v62, %v61
  %v77 = vpack.c.b16 %v64, %v63
  %v78 = vpack.c.b16 %v66, %v65
  %v79 = vpack.c.b16 %v68, %v67
  %v80 = vpack.c.b16 %v70, %v69
  %v81 = vpack.c.b16 %v72, %v71
  %v82 = vpack.c.b16 %v74, %v73
  %v88 = vunpack.c.l.b16 %v31
  %v89 = vunpack.c.l.b16 %v32
  %v90 = vunpack.c.l.b16 %v33
  %v91 = vunpack.c.l.b16 %v34
  %v92 = vunpack.c.l.b16 %v35
  %v93 = vpack.c.b16 %v89, %v88
  %v94 = vpack.c.b16 %v91, %v90
  %v95 = vpack.c.b16 %v92, %v92
  %vm98 = vcmask 326656
  %v100 = vsel %vm98, %v75, 0
  %v103 = vsel %vm98, %v76, 0
  %v106 = vsel %vm98, %v77, 0
  %v109 = vsel %vm98, %v78, 0
  %v112 = vsel %vm98, %v79, 0
  %v115 = vsel %vm98, %v80, 0
  %v118 = vsel %vm98, %v81, 0
  %v121 = vsel %vm98, %v82, 0
  %vm123 = vcmask 1043456
  %v125 = vsel %vm123, %v95, 0
  %127 = vmatprep.subr.bf16.mxu0 0
  %128 = vmatpush1.bf16.msra.mxu0 0
  %129 = vmatprep.subr.bf16.mxu0 0
  %130 = vmatpush1.bf16.msra.mxu0 0
  %131 = vmatprep.subr.bf16.mxu0 0
  %132 = vmatpush1.bf16.msra.mxu0 0
  %133 = vmatprep.subr.bf16.mxu0 0
  %134 = vmatpush1.bf16.msra.mxu0 0
  %135 = vmatprep.subr.bf16.mxu0 0
  %136 = vmatpush1.bf16.msra.mxu0 0
  %137 = vmatprep.subr.bf16.mxu0 0
  %138 = vmatpush1.bf16.msra.mxu0 %v125
  %139 = vmatprep.subr.bf16.mxu0 0
  %140 = vmatpush1.bf16.msra.mxu0 %v94
  %141 = vmatprep.subr.bf16.mxu0 0
  %142 = vmatpush1.bf16.msra.mxu0 %v93
  %143 = vmatprep.subr.bf16.mxu0 0
  %144 = vmatpush2.bf16.msra.mxu0 0
  %145 = vmatprep.subr.bf16.mxu0 0
  %146 = vmatpush2.bf16.msra.mxu0 0
  %147 = vmatprep.subr.bf16.mxu0 0
  %148 = vmatpush2.bf16.msra.mxu0 0
  %149 = vmatprep.subr.bf16.mxu0 0
  %150 = vmatpush2.bf16.msra.mxu0 0
  %151 = vmatprep.subr.bf16.mxu0 0
  %152 = vmatpush2.bf16.msra.mxu0 0
  %153 = vmatprep.subr.bf16.mxu0 0
  %154 = vmatpush2.bf16.msra.mxu0 0
  %155 = vmatprep.subr.bf16.mxu0 0
  %156 = vmatpush2.bf16.msra.mxu0 0
  %157 = vmatprep.subr.bf16.mxu0 0
  %158 = vmatpush2.bf16.msra.mxu0 0
  %159 = vmatprep.mubr.bf16.mxu0 0
  %160 = vmatmul.mubr.bf16.gmra.mxu0 %v100
  %v161 = vpop.f32.mrf.mxu0
  %v162 = vadd.f32 %v41, %v161
  %v163 = vpop.f32.mrf.mxu0
  %v164 = vpop.f32.mrf.mxu0
  %v165 = vadd.f32 %v41, %v164
  %v166 = vpop.f32.mrf.mxu0
  %167 = vmatprep.mubr.bf16.mxu0 0
  %168 = vmatmul.mubr.bf16.gmra.mxu0 %v103
  %v169 = vpop.f32.mrf.mxu0
  %v170 = vadd.f32 %v41, %v169
  %v171 = vpop.f32.mrf.mxu0
  %v172 = vpop.f32.mrf.mxu0
  %v173 = vadd.f32 %v41, %v172
  %v174 = vpop.f32.mrf.mxu0
  %175 = vmatprep.mubr.bf16.mxu0 0
  %176 = vmatmul.mubr.bf16.gmra.mxu0 %v106
  %v177 = vpop.f32.mrf.mxu0
  %v178 = vadd.f32 %v41, %v177
  %v179 = vpop.f32.mrf.mxu0
  %v180 = vpop.f32.mrf.mxu0
  %v181 = vadd.f32 %v41, %v180
  %v182 = vpop.f32.mrf.mxu0
  %183 = vmatprep.mubr.bf16.mxu0 0
  %184 = vmatmul.mubr.bf16.gmra.mxu0 %v109
  %v185 = vpop.f32.mrf.mxu0
  %v186 = vadd.f32 %v41, %v185
  %v187 = vpop.f32.mrf.mxu0
  %v188 = vpop.f32.mrf.mxu0
  %v189 = vadd.f32 %v41, %v188
  %v190 = vpop.f32.mrf.mxu0
  %191 = vmatprep.mubr.bf16.mxu0 0
  %192 = vmatmul.mubr.bf16.gmra.mxu0 %v112
  %v193 = vpop.f32.mrf.mxu0
  %v194 = vadd.f32 %v41, %v193
  %v195 = vpop.f32.mrf.mxu0
  %v196 = vpop.f32.mrf.mxu0
  %v197 = vadd.f32 %v41, %v196
  %v198 = vpop.f32.mrf.mxu0
  %199 = vmatprep.mubr.bf16.mxu0 0
  %200 = vmatmul.mubr.bf16.gmra.mxu0 %v115
  %v201 = vpop.f32.mrf.mxu0
  %v202 = vadd.f32 %v41, %v201
  %v203 = vpop.f32.mrf.mxu0
  %v204 = vpop.f32.mrf.mxu0
  %v205 = vadd.f32 %v41, %v204
  %v206 = vpop.f32.mrf.mxu0
  %207 = vmatprep.mubr.bf16.mxu0 0
  %208 = vmatmul.mubr.bf16.gmra.mxu0 %v118
  %v209 = vpop.f32.mrf.mxu0
  %v210 = vadd.f32 %v41, %v209
  %v211 = vpop.f32.mrf.mxu0
  %v212 = vpop.f32.mrf.mxu0
  %v213 = vadd.f32 %v41, %v212
  %v214 = vpop.f32.mrf.mxu0
  %215 = vmatprep.mubr.bf16.mxu0 0
  %216 = vmatmul.mubr.bf16.gmra.mxu0 %v121
  %v217 = vpop.f32.mrf.mxu0
  %v218 = vadd.f32 %v41, %v217
  %v219 = vpop.f32.mrf.mxu0
  %v220 = vpop.f32.mrf.mxu0
  %v221 = vadd.f32 %v41, %v220
  %v222 = vpop.f32.mrf.mxu0
  %223 = vdwg.mxu0
  %v224 = vxor.u32 %v162, 2147483648
  %v225 = vxor.u32 %v165, 2147483648
  %v226 = vxor.u32 %v170, 2147483648
  %v227 = vxor.u32 %v173, 2147483648
  %v228 = vxor.u32 %v178, 2147483648
  %v229 = vxor.u32 %v181, 2147483648
  %v230 = vxor.u32 %v186, 2147483648
  %v231 = vxor.u32 %v189, 2147483648
  %v232 = vxor.u32 %v194, 2147483648
  %v233 = vxor.u32 %v197, 2147483648
  %v234 = vxor.u32 %v202, 2147483648
  %v235 = vxor.u32 %v205, 2147483648
  %v236 = vxor.u32 %v210, 2147483648
  %v237 = vxor.u32 %v213, 2147483648
  %v238 = vxor.u32 %v218, 2147483648
  %v239 = vxor.u32 %v221, 2147483648
  %v240 = vmul.f32 %v224, 1.442695
  %v241 = vpow.pop %v240
  %v242 = vmul.f32 %v225, 1.442695
  %v243 = vpow.pop %v242
  %v244 = vmul.f32 %v226, 1.442695
  %v245 = vpow.pop %v244
  %v246 = vmul.f32 %v227, 1.442695
  %v247 = vpow.pop %v246
  %v248 = vmul.f32 %v228, 1.442695
  %v249 = vpow.pop %v248
  %v250 = vmul.f32 %v229, 1.442695
  %v251 = vpow.pop %v250
  %v252 = vmul.f32 %v230, 1.442695
  %v253 = vpow.pop %v252
  %v254 = vmul.f32 %v231, 1.442695
  %v255 = vpow.pop %v254
  %v256 = vmul.f32 %v232, 1.442695
  %v257 = vpow.pop %v256
  %v258 = vmul.f32 %v233, 1.442695
  %v259 = vpow.pop %v258
  %v260 = vmul.f32 %v234, 1.442695
  %v261 = vpow.pop %v260
  %v262 = vmul.f32 %v235, 1.442695
  %v263 = vpow.pop %v262
  %v264 = vmul.f32 %v236, 1.442695
  %v265 = vpow.pop %v264
  %v266 = vmul.f32 %v237, 1.442695
  %v267 = vpow.pop %v266
  %v268 = vmul.f32 %v238, 1.442695
  %v269 = vpow.pop %v268
  %v270 = vmul.f32 %v239, 1.442695
  %v271 = vpow.pop %v270
  %v272 = vadd.f32 %v241, 1.0
  %v273 = vadd.f32 %v243, 1.0
  %v274 = vadd.f32 %v245, 1.0
  %v275 = vadd.f32 %v247, 1.0
  %v276 = vadd.f32 %v249, 1.0
  %v277 = vadd.f32 %v251, 1.0
  %v278 = vadd.f32 %v253, 1.0
  %v279 = vadd.f32 %v255, 1.0
  %v280 = vadd.f32 %v257, 1.0
  %v281 = vadd.f32 %v259, 1.0
  %v282 = vadd.f32 %v261, 1.0
  %v283 = vadd.f32 %v263, 1.0
  %v284 = vadd.f32 %v265, 1.0
  %v285 = vadd.f32 %v267, 1.0
  %v286 = vadd.f32 %v269, 1.0
  %v287 = vadd.f32 %v271, 1.0
  %v288 = vrcp.pop %v272
  %v289 = vmul.f32 1.0, %v288
  %v290 = vrcp.pop %v273
  %v291 = vmul.f32 1.0, %v290
  %v292 = vrcp.pop %v274
  %v293 = vmul.f32 1.0, %v292
  %v294 = vrcp.pop %v275
  %v295 = vmul.f32 1.0, %v294
  %v296 = vrcp.pop %v276
  %v297 = vmul.f32 1.0, %v296
  %v298 = vrcp.pop %v277
  %v299 = vmul.f32 1.0, %v298
  %v300 = vrcp.pop %v278
  %v301 = vmul.f32 1.0, %v300
  %v302 = vrcp.pop %v279
  %v303 = vmul.f32 1.0, %v302
  %v304 = vrcp.pop %v280
  %v305 = vmul.f32 1.0, %v304
  %v306 = vrcp.pop %v281
  %v307 = vmul.f32 1.0, %v306
  %v308 = vrcp.pop %v282
  %v309 = vmul.f32 1.0, %v308
  %v310 = vrcp.pop %v283
  %v311 = vmul.f32 1.0, %v310
  %v312 = vrcp.pop %v284
  %v313 = vmul.f32 1.0, %v312
  %v314 = vrcp.pop %v285
  %v315 = vmul.f32 1.0, %v314
  %v316 = vrcp.pop %v286
  %v317 = vmul.f32 1.0, %v316
  %v318 = vrcp.pop %v287
  %v319 = vmul.f32 1.0, %v318
  %v320 = vmul.f32 %v162, %v289
  %v321 = vmul.f32 %v165, %v291
  %v322 = vmul.f32 %v170, %v293
  %v323 = vmul.f32 %v173, %v295
  %v324 = vmul.f32 %v178, %v297
  %v325 = vmul.f32 %v181, %v299
  %v326 = vmul.f32 %v186, %v301
  %v327 = vmul.f32 %v189, %v303
  %v328 = vmul.f32 %v194, %v305
  %v329 = vmul.f32 %v197, %v307
  %v330 = vmul.f32 %v202, %v309
  %v331 = vmul.f32 %v205, %v311
  %v332 = vmul.f32 %v210, %v313
  %v333 = vmul.f32 %v213, %v315
  %v334 = vmul.f32 %v218, %v317
  %v335 = vmul.f32 %v221, %v319
  %v336 = vpack.c.bf16 %v321, %v320
  %v337 = vpack.c.bf16 %v323, %v322
  %v338 = vpack.c.bf16 %v325, %v324
  %v339 = vpack.c.bf16 %v327, %v326
  %v340 = vpack.c.bf16 %v329, %v328
  %v341 = vpack.c.bf16 %v331, %v330
  %v342 = vpack.c.bf16 %v333, %v332
  %v343 = vpack.c.bf16 %v335, %v334
  %v352 = vunpack.c.l.b16 %v336
  %v353 = vunpack.c.h.b16 %v336
  %v354 = vunpack.c.l.b16 %v337
  %v355 = vunpack.c.h.b16 %v337
  %v356 = vunpack.c.l.b16 %v338
  %v357 = vunpack.c.h.b16 %v338
  %v358 = vunpack.c.l.b16 %v339
  %v359 = vunpack.c.h.b16 %v339
  %v360 = vunpack.c.l.b16 %v340
  %v361 = vunpack.c.h.b16 %v340
  %v362 = vunpack.c.l.b16 %v341
  %v363 = vunpack.c.h.b16 %v341
  %v364 = vunpack.c.l.b16 %v342
  %v365 = vunpack.c.h.b16 %v342
  %v366 = vunpack.c.l.b16 %v343
  %v367 = vunpack.c.h.b16 %v343
  %v368 = vpack.c.b16 %v352, %v352
  %v369 = vpack.c.b16 %v353, %v353
  %v370 = vpack.c.b16 %v354, %v354
  %v371 = vpack.c.b16 %v355, %v355
  %v372 = vpack.c.b16 %v356, %v356
  %v373 = vpack.c.b16 %v357, %v357
  %v374 = vpack.c.b16 %v358, %v358
  %v375 = vpack.c.b16 %v359, %v359
  %v376 = vpack.c.b16 %v360, %v360
  %v377 = vpack.c.b16 %v361, %v361
  %v378 = vpack.c.b16 %v362, %v362
  %v379 = vpack.c.b16 %v363, %v363
  %v380 = vpack.c.b16 %v364, %v364
  %v381 = vpack.c.b16 %v365, %v365
  %v382 = vpack.c.b16 %v366, %v366
  %v383 = vpack.c.b16 %v367, %v367
  %400 = vst [vmem:[%s3] sm:$0xf] %v368
  %401 = vst [vmem:[%s3 + $0x4] sm:$0xf] %v369
  %402 = vst [vmem:[%s3 + $0x8] sm:$0xf] %v370
  %403 = vst [vmem:[%s3 + $0xc] sm:$0xf] %v371
  %404 = vst [vmem:[%s3 + $0x10] sm:$0xf] %v372
  %405 = vst [vmem:[%s3 + $0x14] sm:$0xf] %v373
  %406 = vst [vmem:[%s3 + $0x18] sm:$0xf] %v374
  %407 = vst [vmem:[%s3 + $0x1c] sm:$0xf] %v375
  %408 = vst [vmem:[%s3 + $0x20] sm:$0xf] %v376
  %409 = vst [vmem:[%s3 + $0x24] sm:$0xf] %v377
  %410 = vst [vmem:[%s3 + $0x28] sm:$0xf] %v378
  %411 = vst [vmem:[%s3 + $0x2c] sm:$0xf] %v379
  %412 = vst [vmem:[%s3 + $0x30] sm:$0xf] %v380
  %413 = vst [vmem:[%s3 + $0x34] sm:$0xf] %v381
  %414 = vst [vmem:[%s3 + $0x38] sm:$0xf] %v382
  %415 = vst [vmem:[%s3 + $0x3c] sm:$0xf] %v383
  // Predicated region
  $region14: #{cnn_embedder_forward.2} parent=0 // pred_check
    _
  $region15: #{cnn_embedder_forward.2} parent=0 // pred_check_branch
    %417 = sbr.rel (0) target = $region17
  $region16: #{cnn_embedder_forward.2} parent=0 // pred_region
    _
  $region17: #{cnn_embedder_forward.2} parent=0 // pred_fallthru
    _
  // Predicated region
  $region18: #{cnn_embedder_forward.2} parent=0 // pred_check
    _
  $region19: #{cnn_embedder_forward.2} parent=0 // pred_check_branch
    %419 = sbr.rel (0) target = $region21
  $region20: #{cnn_embedder_forward.2} parent=0 // pred_region
    _
  $region21: #{cnn_embedder_forward.2} parent=0 // pred_fallthru
    _

// kernel: cnn_embedder_forward.3
$region0: #{cnn_embedder_forward.3}
  #allocation0 [shape = 'u32[]', space=smem, size = 0x4, offset = 0x4, fixed_abs, tag = 'smem constant byte address 0x4 - core index']
  #allocation1 [shape = 'u32[144,128]{1,0:T(1,128)}', space=vmem, size = 0x12000, scoped, tag = 'internal scratch']
  %s0 = inlined_call_operand.vmem [shape: bf16[32,1152], index: 0, kind: input, shape index: {}]
  %s1 = inlined_call_operand.vmem [shape: bf16[1152,128], index: 1, kind: input, shape index: {}]
  %s2 = inlined_call_operand.vmem [shape: f32[1,128], index: 2, kind: input, shape index: {}]
  %s3 = inlined_call_operand.vmem [shape: bf16[128,128], index: 3, kind: input, shape index: {}]
  %s4 = inlined_call_operand.vmem [shape: f32[1,128], index: 4, kind: input, shape index: {}]
  %s5 = inlined_call_operand.vmem [shape: bf16[128,128], index: 5, kind: input, shape index: {}]
  %s6 = inlined_call_operand.vmem [shape: f32[1,128], index: 6, kind: input, shape index: {}]
  %s7 = inlined_call_operand.hbm [shape: f32[32,128], index: 7, kind: output, shape index: {}]
  %s8 = sld [smem:[#allocation0]]
  $region38: #{cnn_embedder_forward.3} parent=0
    _
  %s10 = ssub.s32 1, %s8
  %s11 = scalar_select 0, %s10, %s8
  $region1: #{cnn_embedder_forward.3} parent=0
    #allocation2 [shape = 'u8[16384]{0}', space=vmem, size = 0x4000, scoped, tag = 'output window, operand 0, single buffered']
    #allocation3 [shape = 's32[1]{0}', space=sflag, size = 0x4, scoped, tag = 'scoped memory for cnn_embedder_forward.3']
    %12 = vsyncpa [#allocation3], 0
    // Predicated region
    $region2: #{cnn_embedder_forward.3} parent=1 // pred_check
      _
    $region3: #{cnn_embedder_forward.3} parent=1 // pred_check_branch
      %14 = sbr.rel (0) target = $region5
    $region4: #{cnn_embedder_forward.3} parent=1 // pred_region
      _
    $region5: #{cnn_embedder_forward.3} parent=1 // pred_fallthru
      _
    // Predicated region
    $region6: #{cnn_embedder_forward.3} parent=1 // pred_check
      _
    $region7: #{cnn_embedder_forward.3} parent=1 // pred_check_branch
      %16 = sbr.rel (0) target = $region9
    $region8: #{cnn_embedder_forward.3} parent=1 // pred_region
      _
    $region9: #{cnn_embedder_forward.3} parent=1 // pred_fallthru
      _
    // Predicated region
    $region10: #{cnn_embedder_forward.3} parent=1 // pred_check
      _
    $region11: #{cnn_embedder_forward.3} parent=1 // pred_check_branch
      %18 = sbr.rel (0) target = $region13
    $region12: #{cnn_embedder_forward.3} parent=1 // pred_region
      _
    $region13: #{cnn_embedder_forward.3} parent=1 // pred_fallthru
      _
    // Predicated region
    $region14: #{cnn_embedder_forward.3} parent=1 // pred_check
      _
    $region15: #{cnn_embedder_forward.3} parent=1 // pred_check_branch
      %20 = sbr.rel (0) target = $region17
    $region16: #{cnn_embedder_forward.3} parent=1 // pred_region
      _
    $region17: #{cnn_embedder_forward.3} parent=1 // pred_fallthru
      _
    // Predicated region
    $region18: #{cnn_embedder_forward.3} parent=1 // pred_check
      _
    $region19: #{cnn_embedder_forward.3} parent=1 // pred_check_branch
      %22 = sbr.rel (0) target = $region21
    $region20: #{cnn_embedder_forward.3} parent=1 // pred_region
      _
    $region21: #{cnn_embedder_forward.3} parent=1 // pred_fallthru
      _
    // Predicated region
    $region22: #{cnn_embedder_forward.3} parent=1 // pred_check
      _
    $region23: #{cnn_embedder_forward.3} parent=1 // pred_check_branch
      %24 = sbr.rel (0) target = $region25
    $region24: #{cnn_embedder_forward.3} parent=1 // pred_region
      _
    $region25: #{cnn_embedder_forward.3} parent=1 // pred_fallthru
      _
    // Predicated region
    $region26: #{cnn_embedder_forward.3} parent=1 // pred_check
      _
    $region27: #{cnn_embedder_forward.3} parent=1 // pred_check_branch
      %26 = sbr.rel (0) target = $region29
    $region28: #{cnn_embedder_forward.3} parent=1 // pred_region
      _
    $region29: #{cnn_embedder_forward.3} parent=1 // pred_fallthru
      _
    %v28 = vld [vmem:[%s0] sm:$0xff]
    %v29 = vld [vmem:[%s0 + $0x8] sm:$0xff]
    %v30 = vld [vmem:[%s0 + $0x10] sm:$0xff]
    %v31 = vld [vmem:[%s0 + $0x18] sm:$0xff]
    %v32 = vld [vmem:[%s0 + $0x20] sm:$0xf]
    %v33 = vld [vmem:[%s0 + $0x24] sm:$0xff]
    %v34 = vld [vmem:[%s0 + $0x2c] sm:$0xff]
    %v35 = vld [vmem:[%s0 + $0x34] sm:$0xff]
    %v36 = vld [vmem:[%s0 + $0x3c] sm:$0xff]
    %v37 = vld [vmem:[%s0 + $0x44] sm:$0xf]
    %v38 = vld [vmem:[%s0 + $0x48] sm:$0xff]
    %v39 = vld [vmem:[%s0 + $0x50] sm:$0xff]
    %v40 = vld [vmem:[%s0 + $0x58] sm:$0xff]
    %v41 = vld [vmem:[%s0 + $0x60] sm:$0xff]
    %v42 = vld [vmem:[%s0 + $0x68] sm:$0xf]
    %v43 = vld [vmem:[%s0 + $0x6c] sm:$0xff]
    %v44 = vld [vmem:[%s0 + $0x74] sm:$0xff]
    %v45 = vld [vmem:[%s0 + $0x7c] sm:$0xff]
    %v46 = vld [vmem:[%s0 + $0x84] sm:$0xff]
    %v47 = vld [vmem:[%s0 + $0x8c] sm:$0xf]
    %v48 = vld [vmem:[%s1] sm:$0xf]
    %v49 = vld [vmem:[%s1 + $0x4] sm:$0xf]
    %v50 = vld [vmem:[%s1 + $0x8] sm:$0xf]
    %v51 = vld [vmem:[%s1 + $0xc] sm:$0xf]
    %v52 = vld [vmem:[%s1 + $0x10] sm:$0xf]
    %v53 = vld [vmem:[%s1 + $0x14] sm:$0xf]
    %v54 = vld [vmem:[%s1 + $0x18] sm:$0xf]
    %v55 = vld [vmem:[%s1 + $0x1c] sm:$0xf]
    %v56 = vld [vmem:[%s1 + $0x20] sm:$0xf]
    %v57 = vld [vmem:[%s1 + $0x24] sm:$0xf]
    %v58 = vld [vmem:[%s1 + $0x28] sm:$0xf]
    %v59 = vld [vmem:[%s1 + $0x2c] sm:$0xf]
    %v60 = vld [vmem:[%s1 + $0x30] sm:$0xf]
    %v61 = vld [vmem:[%s1 + $0x34] sm:$0xf]
    %v62 = vld [vmem:[%s1 + $0x38] sm:$0xf]
    %v63 = vld [vmem:[%s1 + $0x3c] sm:$0xf]
    %v64 = vld [vmem:[%s1 + $0x40] sm:$0xf]
    %v65 = vld [vmem:[%s1 + $0x44] sm:$0xf]
    %v66 = vld [vmem:[%s1 + $0x48] sm:$0xf]
    %v67 = vld [vmem:[%s1 + $0x4c] sm:$0xf]
    %v68 = vld [vmem:[%s1 + $0x50] sm:$0xf]
    %v69 = vld [vmem:[%s1 + $0x54] sm:$0xf]
    %v70 = vld [vmem:[%s1 + $0x58] sm:$0xf]
    %v71 = vld [vmem:[%s1 + $0x5c] sm:$0xf]
    %v72 = vld [vmem:[%s1 + $0x60] sm:$0xf]
    %v73 = vld [vmem:[%s1 + $0x64] sm:$0xf]
    %v74 = vld [vmem:[%s1 + $0x68] sm:$0xf]
    %v75 = vld [vmem:[%s1 + $0x6c] sm:$0xf]
    %v76 = vld [vmem:[%s1 + $0x70] sm:$0xf]
    %v77 = vld [vmem:[%s1 + $0x74] sm:$0xf]
    %v78 = vld [vmem:[%s1 + $0x78] sm:$0xf]
    %v79 = vld [vmem:[%s1 + $0x7c] sm:$0xf]
    %v80 = vld [vmem:[%s1 + $0x80] sm:$0xf]
    %v81 = vld [vmem:[%s1 + $0x84] sm:$0xf]
    %v82 = vld [vmem:[%s1 + $0x88] sm:$0xf]
    %v83 = vld [vmem:[%s1 + $0x8c] sm:$0xf]
    %v84 = vld [vmem:[%s1 + $0x90] sm:$0xf]
    %v85 = vld [vmem:[%s1 + $0x94] sm:$0xf]
    %v86 = vld [vmem:[%s1 + $0x98] sm:$0xf]
    %v87 = vld [vmem:[%s1 + $0x9c] sm:$0xf]
    %v88 = vld [vmem:[%s1 + $0xa0] sm:$0xf]
    %v89 = vld [vmem:[%s1 + $0xa4] sm:$0xf]
    %v90 = vld [vmem:[%s1 + $0xa8] sm:$0xf]
    %v91 = vld [vmem:[%s1 + $0xac] sm:$0xf]
    %v92 = vld [vmem:[%s1 + $0xb0] sm:$0xf]
    %v93 = vld [vmem:[%s1 + $0xb4] sm:$0xf]
    %v94 = vld [vmem:[%s1 + $0xb8] sm:$0xf]
    %v95 = vld [vmem:[%s1 + $0xbc] sm:$0xf]
    %v96 = vld [vmem:[%s1 + $0xc0] sm:$0xf]
    %v97 = vld [vmem:[%s1 + $0xc4] sm:$0xf]
    %v98 = vld [vmem:[%s1 + $0xc8] sm:$0xf]
    %v99 = vld [vmem:[%s1 + $0xcc] sm:$0xf]
    %v100 = vld [vmem:[%s1 + $0xd0] sm:$0xf]
    %v101 = vld [vmem:[%s1 + $0xd4] sm:$0xf]
    %v102 = vld [vmem:[%s1 + $0xd8] sm:$0xf]
    %v103 = vld [vmem:[%s1 + $0xdc] sm:$0xf]
    %v104 = vld [vmem:[%s1 + $0xe0] sm:$0xf]
    %v105 = vld [vmem:[%s1 + $0xe4] sm:$0xf]
    %v106 = vld [vmem:[%s1 + $0xe8] sm:$0xf]
    %v107 = vld [vmem:[%s1 + $0xec] sm:$0xf]
    %v108 = vld [vmem:[%s1 + $0xf0] sm:$0xf]
    %v109 = vld [vmem:[%s1 + $0xf4] sm:$0xf]
    %v110 = vld [vmem:[%s1 + $0xf8] sm:$0xf]
    %v111 = vld [vmem:[%s1 + $0xfc] sm:$0xf]
    %v112 = vld [vmem:[%s1 + $0x100] sm:$0xf]
    %v113 = vld [vmem:[%s1 + $0x104] sm:$0xf]
    %v114 = vld [vmem:[%s1 + $0x108] sm:$0xf]
    %v115 = vld [vmem:[%s1 + $0x10c] sm:$0xf]
    %v116 = vld [vmem:[%s1 + $0x110] sm:$0xf]
    %v117 = vld [vmem:[%s1 + $0x114] sm:$0xf]
    %v118 = vld [vmem:[%s1 + $0x118] sm:$0xf]
    %v119 = vld [vmem:[%s1 + $0x11c] sm:$0xf]
    %v120 = vld [vmem:[%s1 + $0x120] sm:$0xf]
    %v121 = vld [vmem:[%s1 + $0x124] sm:$0xf]
    %v122 = vld [vmem:[%s1 + $0x128] sm:$0xf]
    %v123 = vld [vmem:[%s1 + $0x12c] sm:$0xf]
    %v124 = vld [vmem:[%s1 + $0x130] sm:$0xf]
    %v125 = vld [vmem:[%s1 + $0x134] sm:$0xf]
    %v126 = vld [vmem:[%s1 + $0x138] sm:$0xf]
    %v127 = vld [vmem:[%s1 + $0x13c] sm:$0xf]
    %v128 = vld [vmem:[%s1 + $0x140] sm:$0xf]
    %v129 = vld [vmem:[%s1 + $0x144] sm:$0xf]
    %v130 = vld [vmem:[%s1 + $0x148] sm:$0xf]
    %v131 = vld [vmem:[%s1 + $0x14c] sm:$0xf]
    %v132 = vld [vmem:[%s1 + $0x150] sm:$0xf]
    %v133 = vld [vmem:[%s1 + $0x154] sm:$0xf]
    %v134 = vld [vmem:[%s1 + $0x158] sm:$0xf]
    %v135 = vld [vmem:[%s1 + $0x15c] sm:$0xf]
    %v136 = vld [vmem:[%s1 + $0x160] sm:$0xf]
    %v137 = vld [vmem:[%s1 + $0x164] sm:$0xf]
    %v138 = vld [vmem:[%s1 + $0x168] sm:$0xf]
    %v139 = vld [vmem:[%s1 + $0x16c] sm:$0xf]
    %v140 = vld [vmem:[%s1 + $0x170] sm:$0xf]
    %v141 = vld [vmem:[%s1 + $0x174] sm:$0xf]
    %v142 = vld [vmem:[%s1 + $0x178] sm:$0xf]
    %v143 = vld [vmem:[%s1 + $0x17c] sm:$0xf]
    %v144 = vld [vmem:[%s1 + $0x180] sm:$0xf]
    %v145 = vld [vmem:[%s1 + $0x184] sm:$0xf]
    %v146 = vld [vmem:[%s1 + $0x188] sm:$0xf]
    %v147 = vld [vmem:[%s1 + $0x18c] sm:$0xf]
    %v148 = vld [vmem:[%s1 + $0x190] sm:$0xf]
    %v149 = vld [vmem:[%s1 + $0x194] sm:$0xf]
    %v150 = vld [vmem:[%s1 + $0x198] sm:$0xf]
    %v151 = vld [vmem:[%s1 + $0x19c] sm:$0xf]
    %v152 = vld [vmem:[%s1 + $0x1a0] sm:$0xf]
    %v153 = vld [vmem:[%s1 + $0x1a4] sm:$0xf]
    %v154 = vld [vmem:[%s1 + $0x1a8] sm:$0xf]
    %v155 = vld [vmem:[%s1 + $0x1ac] sm:$0xf]
    %v156 = vld [vmem:[%s1 + $0x1b0] sm:$0xf]
    %v157 = vld [vmem:[%s1 + $0x1b4] sm:$0xf]
    %v158 = vld [vmem:[%s1 + $0x1b8] sm:$0xf]
    %v159 = vld [vmem:[%s1 + $0x1bc] sm:$0xf]
    %v160 = vld [vmem:[%s1 + $0x1c0] sm:$0xf]
    %v161 = vld [vmem:[%s1 + $0x1c4] sm:$0xf]
    %v162 = vld [vmem:[%s1 + $0x1c8] sm:$0xf]
    %v163 = vld [vmem:[%s1 + $0x1cc] sm:$0xf]
    %v164 = vld [vmem:[%s1 + $0x1d0] sm:$0xf]
    %v165 = vld [vmem:[%s1 + $0x1d4] sm:$0xf]
    %v166 = vld [vmem:[%s1 + $0x1d8] sm:$0xf]
    %v167 = vld [vmem:[%s1 + $0x1dc] sm:$0xf]
    %v168 = vld [vmem:[%s1 + $0x1e0] sm:$0xf]
    %v169 = vld [vmem:[%s1 + $0x1e4] sm:$0xf]
    %v170 = vld [vmem:[%s1 + $0x1e8] sm:$0xf]
    %v171 = vld [vmem:[%s1 + $0x1ec] sm:$0xf]
    %v172 = vld [vmem:[%s1 + $0x1f0] sm:$0xf]
    %v173 = vld [vmem:[%s1 + $0x1f4] sm:$0xf]
    %v174 = vld [vmem:[%s1 + $0x1f8] sm:$0xf]
    %v175 = vld [vmem:[%s1 + $0x1fc] sm:$0xf]
    %v176 = vld [vmem:[%s1 + $0x200] sm:$0xf]
    %v177 = vld [vmem:[%s1 + $0x204] sm:$0xf]
    %v178 = vld [vmem:[%s1 + $0x208] sm:$0xf]
    %v179 = vld [vmem:[%s1 + $0x20c] sm:$0xf]
    %v180 = vld [vmem:[%s1 + $0x210] sm:$0xf]
    %v181 = vld [vmem:[%s1 + $0x214] sm:$0xf]
    %v182 = vld [vmem:[%s1 + $0x218] sm:$0xf]
    %v183 = vld [vmem:[%s1 + $0x21c] sm:$0xf]
    %v184 = vld [vmem:[%s1 + $0x220] sm:$0xf]
    %v185 = vld [vmem:[%s1 + $0x224] sm:$0xf]
    %v186 = vld [vmem:[%s1 + $0x228] sm:$0xf]
    %v187 = vld [vmem:[%s1 + $0x22c] sm:$0xf]
    %v188 = vld [vmem:[%s1 + $0x230] sm:$0xf]
    %v189 = vld [vmem:[%s1 + $0x234] sm:$0xf]
    %v190 = vld [vmem:[%s1 + $0x238] sm:$0xf]
    %v191 = vld [vmem:[%s1 + $0x23c] sm:$0xf]
    %v192 = vld [vmem:[%s2] sm:$0x1]
    %v194 = vlaneseq
    %v195 = vshrl.u32 %v194, 7
    %v196 = vsub.s32 0, %v195
    %v197 = vrot.slane %v192, %v196
    %v219 = vunpack.c.l.b16 %v28
    %v220 = vunpack.c.h.b16 %v28
    %v221 = vunpack.c.l.b16 %v29
    %v222 = vunpack.c.h.b16 %v29
    %v223 = vunpack.c.l.b16 %v30
    %v224 = vunpack.c.h.b16 %v30
    %v225 = vunpack.c.l.b16 %v31
    %v226 = vunpack.c.h.b16 %v31
    %v227 = vunpack.c.l.b16 %v32
    %v228 = vunpack.c.l.b16 %v33
    %v229 = vunpack.c.h.b16 %v33
    %v230 = vunpack.c.l.b16 %v34
    %v231 = vunpack.c.h.b16 %v34
    %v232 = vunpack.c.l.b16 %v35
    %v233 = vunpack.c.h.b16 %v35
    %v234 = vunpack.c.l.b16 %v36
    %v235 = vunpack.c.h.b16 %v36
    %v236 = vunpack.c.l.b16 %v37
    %v237 = vunpack.c.l.b16 %v38
    %v238 = vunpack.c.h.b16 %v38
    %v239 = vunpack.c.l.b16 %v39
    %v240 = vunpack.c.h.b16 %v39
    %v241 = vunpack.c.l.b16 %v40
    %v242 = vunpack.c.h.b16 %v40
    %v243 = vunpack.c.l.b16 %v41
    %v244 = vunpack.c.h.b16 %v41
    %v245 = vunpack.c.l.b16 %v42
    %v246 = vunpack.c.l.b16 %v43
    %v247 = vunpack.c.h.b16 %v43
    %v248 = vunpack.c.l.b16 %v44
    %v249 = vunpack.c.h.b16 %v44
    %v250 = vunpack.c.l.b16 %v45
    %v251 = vunpack.c.h.b16 %v45
    %v252 = vunpack.c.l.b16 %v46
    %v253 = vunpack.c.h.b16 %v46
    %v254 = vunpack.c.l.b16 %v47
    %v255 = vpack.c.b16 %v228, %v219
    %v256 = vpack.c.b16 %v229, %v220
    %v257 = vpack.c.b16 %v230, %v221
    %v258 = vpack.c.b16 %v231, %v222
    %v259 = vpack.c.b16 %v232, %v223
    %v260 = vpack.c.b16 %v233, %v224
    %v261 = vpack.c.b16 %v234, %v225
    %v262 = vpack.c.b16 %v235, %v226
    %v263 = vpack.c.b16 %v236, %v227
    %v264 = vpack.c.b16 %v246, %v237
    %v265 = vpack.c.b16 %v247, %v238
    %v266 = vpack.c.b16 %v248, %v239
    %v267 = vpack.c.b16 %v249, %v240
    %v268 = vpack.c.b16 %v250, %v241
    %v269 = vpack.c.b16 %v251, %v242
    %v270 = vpack.c.b16 %v252, %v243
    %v271 = vpack.c.b16 %v253, %v244
    %v272 = vpack.c.b16 %v254, %v245
    %v435 = vunpack.c.l.b16 %v48
    %v436 = vunpack.c.l.b16 %v49
    %v437 = vunpack.c.l.b16 %v50
    %v438 = vunpack.c.l.b16 %v51
    %v439 = vunpack.c.l.b16 %v52
    %v440 = vunpack.c.l.b16 %v53
    %v441 = vunpack.c.l.b16 %v54
    %v442 = vunpack.c.l.b16 %v55
    %v443 = vunpack.c.l.b16 %v56
    %v444 = vunpack.c.l.b16 %v57
    %v445 = vunpack.c.l.b16 %v58
    %v446 = vunpack.c.l.b16 %v59
    %v447 = vunpack.c.l.b16 %v60
    %v448 = vunpack.c.l.b16 %v61
    %v449 = vunpack.c.l.b16 %v62
    %v450 = vunpack.c.l.b16 %v63
    %v451 = vunpack.c.l.b16 %v64
    %v452 = vunpack.c.l.b16 %v65
    %v453 = vunpack.c.l.b16 %v66
    %v454 = vunpack.c.l.b16 %v67
    %v455 = vunpack.c.l.b16 %v68
    %v456 = vunpack.c.l.b16 %v69
    %v457 = vunpack.c.l.b16 %v70
    %v458 = vunpack.c.l.b16 %v71
    %v459 = vunpack.c.l.b16 %v72
    %v460 = vunpack.c.l.b16 %v73
    %v461 = vunpack.c.l.b16 %v74
    %v462 = vunpack.c.l.b16 %v75
    %v463 = vunpack.c.l.b16 %v76
    %v464 = vunpack.c.l.b16 %v77
    %v465 = vunpack.c.l.b16 %v78
    %v466 = vunpack.c.l.b16 %v79
    %v467 = vunpack.c.l.b16 %v80
    %v468 = vunpack.c.l.b16 %v81
    %v469 = vunpack.c.l.b16 %v82
    %v470 = vunpack.c.l.b16 %v83
    %v471 = vunpack.c.l.b16 %v84
    %v472 = vunpack.c.l.b16 %v85
    %v473 = vunpack.c.l.b16 %v86
    %v474 = vunpack.c.l.b16 %v87
    %v475 = vunpack.c.l.b16 %v88
    %v476 = vunpack.c.l.b16 %v89
    %v477 = vunpack.c.l.b16 %v90
    %v478 = vunpack.c.l.b16 %v91
    %v479 = vunpack.c.l.b16 %v92
    %v480 = vunpack.c.l.b16 %v93
    %v481 = vunpack.c.l.b16 %v94
    %v482 = vunpack.c.l.b16 %v95
    %v483 = vunpack.c.l.b16 %v96
    %v484 = vunpack.c.l.b16 %v97
    %v485 = vunpack.c.l.b16 %v98
    %v486 = vunpack.c.l.b16 %v99
    %v487 = vunpack.c.l.b16 %v100
    %v488 = vunpack.c.l.b16 %v101
    %v489 = vunpack.c.l.b16 %v102
    %v490 = vunpack.c.l.b16 %v103
    %v491 = vunpack.c.l.b16 %v104
    %v492 = vunpack.c.l.b16 %v105
    %v493 = vunpack.c.l.b16 %v106
    %v494 = vunpack.c.l.b16 %v107
    %v495 = vunpack.c.l.b16 %v108
    %v496 = vunpack.c.l.b16 %v109
    %v497 = vunpack.c.l.b16 %v110
    %v498 = vunpack.c.l.b16 %v111
    %v499 = vunpack.c.l.b16 %v112
    %v500 = vunpack.c.l.b16 %v113
    %v501 = vunpack.c.l.b16 %v114
    %v502 = vunpack.c.l.b16 %v115
    %v503 = vunpack.c.l.b16 %v116
    %v504 = vunpack.c.l.b16 %v117
    %v505 = vunpack.c.l.b16 %v118
    %v506 = vunpack.c.l.b16 %v119
    %v507 = vunpack.c.l.b16 %v120
    %v508 = vunpack.c.l.b16 %v121
    %v509 = vunpack.c.l.b16 %v122
    %v510 = vunpack.c.l.b16 %v123
    %v511 = vunpack.c.l.b16 %v124
    %v512 = vunpack.c.l.b16 %v125
    %v513 = vunpack.c.l.b16 %v126
    %v514 = vunpack.c.l.b16 %v127
    %v515 = vunpack.c.l.b16 %v128
    %v516 = vunpack.c.l.b16 %v129
    %v517 = vunpack.c.l.b16 %v130
    %v518 = vunpack.c.l.b16 %v131
    %v519 = vunpack.c.l.b16 %v132
    %v520 = vunpack.c.l.b16 %v133
    %v521 = vunpack.c.l.b16 %v134
    %v522 = vunpack.c.l.b16 %v135
    %v523 = vunpack.c.l.b16 %v136
    %v524 = vunpack.c.l.b16 %v137
    %v525 = vunpack.c.l.b16 %v138
    %v526 = vunpack.c.l.b16 %v139
    %v527 = vunpack.c.l.b16 %v140
    %v528 = vunpack.c.l.b16 %v141
    %v529 = vunpack.c.l.b16 %v142
    %v530 = vunpack.c.l.b16 %v143
    %v531 = vunpack.c.l.b16 %v144
    %v532 = vunpack.c.l.b16 %v145
    %v533 = vunpack.c.l.b16 %v146
    %v534 = vunpack.c.l.b16 %v147
    %v535 = vunpack.c.l.b16 %v148
    %v536 = vunpack.c.l.b16 %v149
    %v537 = vunpack.c.l.b16 %v150
    %v538 = vunpack.c.l.b16 %v151
    %v539 = vunpack.c.l.b16 %v152
    %v540 = vunpack.c.l.b16 %v153
    %v541 = vunpack.c.l.b16 %v154
    %v542 = vunpack.c.l.b16 %v155
    %v543 = vunpack.c.l.b16 %v156
    %v544 = vunpack.c.l.b16 %v157
    %v545 = vunpack.c.l.b16 %v158
    %v546 = vunpack.c.l.b16 %v159
    %v547 = vunpack.c.l.b16 %v160
    %v548 = vunpack.c.l.b16 %v161
    %v549 = vunpack.c.l.b16 %v162
    %v550 = vunpack.c.l.b16 %v163
    %v551 = vunpack.c.l.b16 %v164
    %v552 = vunpack.c.l.b16 %v165
    %v553 = vunpack.c.l.b16 %v166
    %v554 = vunpack.c.l.b16 %v167
    %v555 = vunpack.c.l.b16 %v168
    %v556 = vunpack.c.l.b16 %v169
    %v557 = vunpack.c.l.b16 %v170
    %v558 = vunpack.c.l.b16 %v171
    %v559 = vunpack.c.l.b16 %v172
    %v560 = vunpack.c.l.b16 %v173
    %v561 = vunpack.c.l.b16 %v174
    %v562 = vunpack.c.l.b16 %v175
    %v563 = vunpack.c.l.b16 %v176
    %v564 = vunpack.c.l.b16 %v177
    %v565 = vunpack.c.l.b16 %v178
    %v566 = vunpack.c.l.b16 %v179
    %v567 = vunpack.c.l.b16 %v180
    %v568 = vunpack.c.l.b16 %v181
    %v569 = vunpack.c.l.b16 %v182
    %v570 = vunpack.c.l.b16 %v183
    %v571 = vunpack.c.l.b16 %v184
    %v572 = vunpack.c.l.b16 %v185
    %v573 = vunpack.c.l.b16 %v186
    %v574 = vunpack.c.l.b16 %v187
    %v575 = vunpack.c.l.b16 %v188
    %v576 = vunpack.c.l.b16 %v189
    %v577 = vunpack.c.l.b16 %v190
    %v578 = vunpack.c.l.b16 %v191
    %v579 = vpack.c.b16 %v436, %v435
    %v580 = vpack.c.b16 %v438, %v437
    %v581 = vpack.c.b16 %v440, %v439
    %v582 = vpack.c.b16 %v442, %v441
    %v583 = vpack.c.b16 %v444, %v443
    %v584 = vpack.c.b16 %v446, %v445
    %v585 = vpack.c.b16 %v448, %v447
    %v586 = vpack.c.b16 %v450, %v449
    %v587 = vpack.c.b16 %v452, %v451
    %v588 = vpack.c.b16 %v454, %v453
    %v589 = vpack.c.b16 %v456, %v455
    %v590 = vpack.c.b16 %v458, %v457
    %v591 = vpack.c.b16 %v460, %v459
    %v592 = vpack.c.b16 %v462, %v461
    %v593 = vpack.c.b16 %v464, %v463
    %v594 = vpack.c.b16 %v466, %v465
    %v595 = vpack.c.b16 %v468, %v467
    %v596 = vpack.c.b16 %v470, %v469
    %v597 = vpack.c.b16 %v472, %v471
    %v598 = vpack.c.b16 %v474, %v473
    %v599 = vpack.c.b16 %v476, %v475
    %v600 = vpack.c.b16 %v478, %v477
    %v601 = vpack.c.b16 %v480, %v479
    %v602 = vpack.c.b16 %v482, %v481
    %v603 = vpack.c.b16 %v484, %v483
    %v604 = vpack.c.b16 %v486, %v485
    %v605 = vpack.c.b16 %v488, %v487
    %v606 = vpack.c.b16 %v490, %v489
    %v607 = vpack.c.b16 %v492, %v491
    %v608 = vpack.c.b16 %v494, %v493
    %v609 = vpack.c.b16 %v496, %v495
    %v610 = vpack.c.b16 %v498, %v497
    %v611 = vpack.c.b16 %v500, %v499
    %v612 = vpack.c.b16 %v502, %v501
    %v613 = vpack.c.b16 %v504, %v503
    %v614 = vpack.c.b16 %v506, %v505
    %v615 = vpack.c.b16 %v508, %v507
    %v616 = vpack.c.b16 %v510, %v509
    %v617 = vpack.c.b16 %v512, %v511
    %v618 = vpack.c.b16 %v514, %v513
    %v619 = vpack.c.b16 %v516, %v515
    %v620 = vpack.c.b16 %v518, %v517
    %v621 = vpack.c.b16 %v520, %v519
    %v622 = vpack.c.b16 %v522, %v521
    %v623 = vpack.c.b16 %v524, %v523
    %v624 = vpack.c.b16 %v526, %v525
    %v625 = vpack.c.b16 %v528, %v527
    %v626 = vpack.c.b16 %v530, %v529
    %v627 = vpack.c.b16 %v532, %v531
    %v628 = vpack.c.b16 %v534, %v533
    %v629 = vpack.c.b16 %v536, %v535
    %v630 = vpack.c.b16 %v538, %v537
    %v631 = vpack.c.b16 %v540, %v539
    %v632 = vpack.c.b16 %v542, %v541
    %v633 = vpack.c.b16 %v544, %v543
    %v634 = vpack.c.b16 %v546, %v545
    %v635 = vpack.c.b16 %v548, %v547
    %v636 = vpack.c.b16 %v550, %v549
    %v637 = vpack.c.b16 %v552, %v551
    %v638 = vpack.c.b16 %v554, %v553
    %v639 = vpack.c.b16 %v556, %v555
    %v640 = vpack.c.b16 %v558, %v557
    %v641 = vpack.c.b16 %v560, %v559
    %v642 = vpack.c.b16 %v562, %v561
    %v643 = vpack.c.b16 %v564, %v563
    %v644 = vpack.c.b16 %v566, %v565
    %v645 = vpack.c.b16 %v568, %v567
    %v646 = vpack.c.b16 %v570, %v569
    %v647 = vpack.c.b16 %v572, %v571
    %v648 = vpack.c.b16 %v574, %v573
    %v649 = vpack.c.b16 %v576, %v575
    %v650 = vpack.c.b16 %v578, %v577
    %723 = vmatprep.subr.bf16.mxu0 0
    %724 = vmatpush1.bf16.msra.mxu0 %v586
    %725 = vmatprep.subr.bf16.mxu0 0
    %726 = vmatpush1.bf16.msra.mxu0 %v585
    %727 = vmatprep.subr.bf16.mxu0 0
    %728 = vmatpush1.bf16.msra.mxu0 %v584
    %729 = vmatprep.subr.bf16.mxu0 0
    %730 = vmatpush1.bf16.msra.mxu0 %v583
    %731 = vmatprep.subr.bf16.mxu0 0
    %732 = vmatpush1.bf16.msra.mxu0 %v582
    %733 = vmatprep.subr.bf16.mxu0 0
    %734 = vmatpush1.bf16.msra.mxu0 %v581
    %735 = vmatprep.subr.bf16.mxu0 0
    %736 = vmatpush1.bf16.msra.mxu0 %v580
    %737 = vmatprep.subr.bf16.mxu0 0
    %738 = vmatpush1.bf16.msra.mxu0 %v579
    %739 = vmatprep.subr.bf16.mxu0 0
    %740 = vmatpush2.bf16.msra.mxu0 %v594
    %741 = vmatprep.subr.bf16.mxu0 0
    %742 = vmatpush2.bf16.msra.mxu0 %v593
    %743 = vmatprep.subr.bf16.mxu0 0
    %744 = vmatpush2.bf16.msra.mxu0 %v592
    %745 = vmatprep.subr.bf16.mxu0 0
    %746 = vmatpush2.bf16.msra.mxu0 %v591
    %747 = vmatprep.subr.bf16.mxu0 0
    %748 = vmatpush2.bf16.msra.mxu0 %v590
    %749 = vmatprep.subr.bf16.mxu0 0
    %750 = vmatpush2.bf16.msra.mxu0 %v589
    %751 = vmatprep.subr.bf16.mxu0 0
    %752 = vmatpush2.bf16.msra.mxu0 %v588
    %753 = vmatprep.subr.bf16.mxu0 0
    %754 = vmatpush2.bf16.msra.mxu0 %v587
    %755 = vmatprep.mubr.bf16.mxu0 %v256
    %756 = vmatmul.mubr.bf16.gmra.mxu0 %v255
    %v757 = vpop.f32.mrf.mxu0
    %v758 = vadd.f32 %v197, %v757
    %v759 = vpop.f32.mrf.mxu0
    %v760 = vpop.f32.mrf.mxu0
    %v761 = vadd.f32 %v197, %v760
    %v762 = vpop.f32.mrf.mxu0
    %763 = vmatprep.mubr.bf16.mxu0 %v265
    %764 = vmatmul.mubr.bf16.gmra.mxu0 %v264
    %v765 = vpop.f32.mrf.mxu0
    %v766 = vadd.f32 %v197, %v765
    %v767 = vpop.f32.mrf.mxu0
    %v768 = vpop.f32.mrf.mxu0
    %v769 = vadd.f32 %v197, %v768
    %v770 = vpop.f32.mrf.mxu0
    %771 = vdwg.mxu0
    %772 = vmatprep.subr.bf16.mxu0 0
    %773 = vmatpush1.bf16.msra.mxu0 %v602
    %774 = vmatprep.subr.bf16.mxu0 0
    %775 = vmatpush1.bf16.msra.mxu0 %v601
    %776 = vmatprep.subr.bf16.mxu0 0
    %777 = vmatpush1.bf16.msra.mxu0 %v600
    %778 = vmatprep.subr.bf16.mxu0 0
    %779 = vmatpush1.bf16.msra.mxu0 %v599
    %780 = vmatprep.subr.bf16.mxu0 0
    %781 = vmatpush1.bf16.msra.mxu0 %v598
    %782 = vmatprep.subr.bf16.mxu0 0
    %783 = vmatpush1.bf16.msra.mxu0 %v597
    %784 = vmatprep.subr.bf16.mxu0 0
    %785 = vmatpush1.bf16.msra.mxu0 %v596
    %786 = vmatprep.subr.bf16.mxu0 0
    %787 = vmatpush1.bf16.msra.mxu0 %v595
    %788 = vmatprep.subr.bf16.mxu0 0
    %789 = vmatpush2.bf16.msra.mxu0 %v610
    %790 = vmatprep.subr.bf16.mxu0 0
    %791 = vmatpush2.bf16.msra.mxu0 %v609
    %792 = vmatprep.subr.bf16.mxu0 0
    %793 = vmatpush2.bf16.msra.mxu0 %v608
    %794 = vmatprep.subr.bf16.mxu0 0
    %795 = vmatpush2.bf16.msra.mxu0 %v607
    %796 = vmatprep.subr.bf16.mxu0 0
    %797 = vmatpush2.bf16.msra.mxu0 %v606
    %798 = vmatprep.subr.bf16.mxu0 0
    %799 = vmatpush2.bf16.msra.mxu0 %v605
    %800 = vmatprep.subr.bf16.mxu0 0
    %801 = vmatpush2.bf16.msra.mxu0 %v604
    %802 = vmatprep.subr.bf16.mxu0 0
    %803 = vmatpush2.bf16.msra.mxu0 %v603
    %804 = vmatprep.mubr.bf16.mxu0 %v258
    %805 = vmatmul.mubr.bf16.gmra.mxu0 %v257
    %v806 = vpop.f32.mrf.mxu0
    %v807 = vadd.f32 %v758, %v806
    %v808 = vpop.f32.mrf.mxu0
    %v809 = vpop.f32.mrf.mxu0
    %v810 = vadd.f32 %v761, %v809
    %v811 = vpop.f32.mrf.mxu0
    %812 = vmatprep.mubr.bf16.mxu0 %v267
    %813 = vmatmul.mubr.bf16.gmra.mxu0 %v266
    %v814 = vpop.f32.mrf.mxu0
    %v815 = vadd.f32 %v766, %v814
    %v816 = vpop.f32.mrf.mxu0
    %v817 = vpop.f32.mrf.mxu0
    %v818 = vadd.f32 %v769, %v817
    %v819 = vpop.f32.mrf.mxu0
    %820 = vdwg.mxu0
    %821 = vmatprep.subr.bf16.mxu0 0
    %822 = vmatpush1.bf16.msra.mxu0 %v618
    %823 = vmatprep.subr.bf16.mxu0 0
    %824 = vmatpush1.bf16.msra.mxu0 %v617
    %825 = vmatprep.subr.bf16.mxu0 0
    %826 = vmatpush1.bf16.msra.mxu0 %v616
    %827 = vmatprep.subr.bf16.mxu0 0
    %828 = vmatpush1.bf16.msra.mxu0 %v615
    %829 = vmatprep.subr.bf16.mxu0 0
    %830 = vmatpush1.bf16.msra.mxu0 %v614
    %831 = vmatprep.subr.bf16.mxu0 0
    %832 = vmatpush1.bf16.msra.mxu0 %v613
    %833 = vmatprep.subr.bf16.mxu0 0
    %834 = vmatpush1.bf16.msra.mxu0 %v612
    %835 = vmatprep.subr.bf16.mxu0 0
    %836 = vmatpush1.bf16.msra.mxu0 %v611
    %837 = vmatprep.subr.bf16.mxu0 0
    %838 = vmatpush2.bf16.msra.mxu0 %v626
    %839 = vmatprep.subr.bf16.mxu0 0
    %840 = vmatpush2.bf16.msra.mxu0 %v625
    %841 = vmatprep.subr.bf16.mxu0 0
    %842 = vmatpush2.bf16.msra.mxu0 %v624
    %843 = vmatprep.subr.bf16.mxu0 0
    %844 = vmatpush2.bf16.msra.mxu0 %v623
    %845 = vmatprep.subr.bf16.mxu0 0
    %846 = vmatpush2.bf16.msra.mxu0 %v622
    %847 = vmatprep.subr.bf16.mxu0 0
    %848 = vmatpush2.bf16.msra.mxu0 %v621
    %849 = vmatprep.subr.bf16.mxu0 0
    %850 = vmatpush2.bf16.msra.mxu0 %v620
    %851 = vmatprep.subr.bf16.mxu0 0
    %852 = vmatpush2.bf16.msra.mxu0 %v619
    %853 = vmatprep.mubr.bf16.mxu0 %v260
    %854 = vmatmul.mubr.bf16.gmra.mxu0 %v259
    %v855 = vpop.f32.mrf.mxu0
    %v856 = vadd.f32 %v807, %v855
    %v857 = vpop.f32.mrf.mxu0
    %v858 = vpop.f32.mrf.mxu0
    %v859 = vadd.f32 %v810, %v858
    %v860 = vpop.f32.mrf.mxu0
    %861 = vmatprep.mubr.bf16.mxu0 %v269
    %862 = vmatmul.mubr.bf16.gmra.mxu0 %v268
    %v863 = vpop.f32.mrf.mxu0
    %v864 = vadd.f32 %v815, %v863
    %v865 = vpop.f32.mrf.mxu0
    %v866 = vpop.f32.mrf.mxu0
    %v867 = vadd.f32 %v818, %v866
    %v868 = vpop.f32.mrf.mxu0
    %869 = vdwg.mxu0
    %870 = vmatprep.subr.bf16.mxu0 0
    %871 = vmatpush1.bf16.msra.mxu0 %v634
    %872 = vmatprep.subr.bf16.mxu0 0
    %873 = vmatpush1.bf16.msra.mxu0 %v633
    %874 = vmatprep.subr.bf16.mxu0 0
    %875 = vmatpush1.bf16.msra.mxu0 %v632
    %876 = vmatprep.subr.bf16.mxu0 0
    %877 = vmatpush1.bf16.msra.mxu0 %v631
    %878 = vmatprep.subr.bf16.mxu0 0
    %879 = vmatpush1.bf16.msra.mxu0 %v630
    %880 = vmatprep.subr.bf16.mxu0 0
    %881 = vmatpush1.bf16.msra.mxu0 %v629
    %882 = vmatprep.subr.bf16.mxu0 0
    %883 = vmatpush1.bf16.msra.mxu0 %v628
    %884 = vmatprep.subr.bf16.mxu0 0
    %885 = vmatpush1.bf16.msra.mxu0 %v627
    %886 = vmatprep.subr.bf16.mxu0 0
    %887 = vmatpush2.bf16.msra.mxu0 %v642
    %888 = vmatprep.subr.bf16.mxu0 0
    %889 = vmatpush2.bf16.msra.mxu0 %v641
    %890 = vmatprep.subr.bf16.mxu0 0
    %891 = vmatpush2.bf16.msra.mxu0 %v640
    %892 = vmatprep.subr.bf16.mxu0 0
    %893 = vmatpush2.bf16.msra.mxu0 %v639
    %894 = vmatprep.subr.bf16.mxu0 0
    %895 = vmatpush2.bf16.msra.mxu0 %v638
    %896 = vmatprep.subr.bf16.mxu0 0
    %897 = vmatpush2.bf16.msra.mxu0 %v637
    %898 = vmatprep.subr.bf16.mxu0 0
    %899 = vmatpush2.bf16.msra.mxu0 %v636
    %900 = vmatprep.subr.bf16.mxu0 0
    %901 = vmatpush2.bf16.msra.mxu0 %v635
    %902 = vmatprep.mubr.bf16.mxu0 %v262
    %903 = vmatmul.mubr.bf16.gmra.mxu0 %v261
    %v904 = vpop.f32.mrf.mxu0
    %v905 = vadd.f32 %v856, %v904
    %v906 = vpop.f32.mrf.mxu0
    %v907 = vpop.f32.mrf.mxu0
    %v908 = vadd.f32 %v859, %v907
    %v909 = vpop.f32.mrf.mxu0
    %910 = vmatprep.mubr.bf16.mxu0 %v271
    %911 = vmatmul.mubr.bf16.gmra.mxu0 %v270
    %v912 = vpop.f32.mrf.mxu0
    %v913 = vadd.f32 %v864, %v912
    %v914 = vpop.f32.mrf.mxu0
    %v915 = vpop.f32.mrf.mxu0
    %v916 = vadd.f32 %v867, %v915
    %v917 = vpop.f32.mrf.mxu0
    %918 = vdwg.mxu0
    %919 = vmatprep.subr.bf16.mxu0 0
    %920 = vmatpush1.bf16.msra.mxu0 %v650
    %921 = vmatprep.subr.bf16.mxu0 0
    %922 = vmatpush1.bf16.msra.mxu0 %v649
    %923 = vmatprep.subr.bf16.mxu0 0
    %924 = vmatpush1.bf16.msra.mxu0 %v648
    %925 = vmatprep.subr.bf16.mxu0 0
    %926 = vmatpush1.bf16.msra.mxu0 %v647
    %927 = vmatprep.subr.bf16.mxu0 0
    %928 = vmatpush1.bf16.msra.mxu0 %v646
    %929 = vmatprep.subr.bf16.mxu0 0
    %930 = vmatpush1.bf16.msra.mxu0 %v645
    %931 = vmatprep.subr.bf16.mxu0 0
    %932 = vmatpush1.bf16.msra.mxu0 %v644
    %933 = vmatprep.subr.bf16.mxu0 0
    %934 = vmatpush1.bf16.msra.mxu0 %v643
    %935 = vmatprep.subr.bf16.mxu0 0
    %936 = vmatpush2.bf16.msra.mxu0 0
    %937 = vmatprep.subr.bf16.mxu0 0
    %938 = vmatpush2.bf16.msra.mxu0 0
    %939 = vmatprep.subr.bf16.mxu0 0
    %940 = vmatpush2.bf16.msra.mxu0 0
    %941 = vmatprep.subr.bf16.mxu0 0
    %942 = vmatpush2.bf16.msra.mxu0 0
    %943 = vmatprep.subr.bf16.mxu0 0
    %944 = vmatpush2.bf16.msra.mxu0 0
    %945 = vmatprep.subr.bf16.mxu0 0
    %946 = vmatpush2.bf16.msra.mxu0 0
    %947 = vmatprep.subr.bf16.mxu0 0
    %948 = vmatpush2.bf16.msra.mxu0 0
    %949 = vmatprep.subr.bf16.mxu0 0
    %950 = vmatpush2.bf16.msra.mxu0 0
    %951 = vmatprep.mubr.bf16.mxu0 0
    %952 = vmatmul.mubr.bf16.gmra.mxu0 %v263
    %v953 = vpop.f32.mrf.mxu0
    %v954 = vadd.f32 %v905, %v953
    %v955 = vpop.f32.mrf.mxu0
    %v956 = vpop.f32.mrf.mxu0
    %v957 = vadd.f32 %v908, %v956
    %v958 = vpop.f32.mrf.mxu0
    %959 = vmatprep.mubr.bf16.mxu0 0
    %960 = vmatmul.mubr.bf16.gmra.mxu0 %v272
    %v961 = vpop.f32.mrf.mxu0
    %v962 = vadd.f32 %v913, %v961
    %v963 = vpop.f32.mrf.mxu0
    %v964 = vpop.f32.mrf.mxu0
    %v965 = vadd.f32 %v916, %v964
    %v966 = vpop.f32.mrf.mxu0
    %967 = vdwg.mxu0
    %v968 = vxor.u32 %v954, 2147483648
    %v969 = vxor.u32 %v957, 2147483648
    %v970 = vxor.u32 %v962, 2147483648
    %v971 = vxor.u32 %v965, 2147483648
    %v972 = vmul.f32 %v968, 1.442695
    %v973 = vpow.pop %v972
    %v974 = vmul.f32 %v969, 1.442695
    %v975 = vpow.pop %v974
    %v976 = vmul.f32 %v970, 1.442695
    %v977 = vpow.pop %v976
    %v978 = vmul.f32 %v971, 1.442695
    %v979 = vpow.pop %v978
    %v980 = vadd.f32 %v973, 1.0
    %v981 = vadd.f32 %v975, 1.0
    %v982 = vadd.f32 %v977, 1.0
    %v983 = vadd.f32 %v979, 1.0
    %v984 = vrcp.pop %v980
    %v985 = vmul.f32 1.0, %v984
    %v986 = vrcp.pop %v981
    %v987 = vmul.f32 1.0, %v986
    %v988 = vrcp.pop %v982
    %v989 = vmul.f32 1.0, %v988
    %v990 = vrcp.pop %v983
    %v991 = vmul.f32 1.0, %v990
    %v992 = vmul.f32 %v954, %v985
    %v993 = vmul.f32 %v957, %v987
    %v994 = vmul.f32 %v962, %v989
    %v995 = vmul.f32 %v965, %v991
    %v996 = vpack.c.bf16 %v993, %v992
    %v997 = vpack.c.bf16 %v995, %v994
    %v998 = vld [vmem:[%s3] sm:$0xf]
    %v999 = vld [vmem:[%s3 + $0x4] sm:$0xf]
    %v1000 = vld [vmem:[%s3 + $0x8] sm:$0xf]
    %v1001 = vld [vmem:[%s3 + $0xc] sm:$0xf]
    %v1002 = vld [vmem:[%s3 + $0x10] sm:$0xf]
    %v1003 = vld [vmem:[%s3 + $0x14] sm:$0xf]
    %v1004 = vld [vmem:[%s3 + $0x18] sm:$0xf]
    %v1005 = vld [vmem:[%s3 + $0x1c] sm:$0xf]
    %v1006 = vld [vmem:[%s3 + $0x20] sm:$0xf]
    %v1007 = vld [vmem:[%s3 + $0x24] sm:$0xf]
    %v1008 = vld [vmem:[%s3 + $0x28] sm:$0xf]
    %v1009 = vld [vmem:[%s3 + $0x2c] sm:$0xf]
    %v1010 = vld [vmem:[%s3 + $0x30] sm:$0xf]
    %v1011 = vld [vmem:[%s3 + $0x34] sm:$0xf]
    %v1012 = vld [vmem:[%s3 + $0x38] sm:$0xf]
    %v1013 = vld [vmem:[%s3 + $0x3c] sm:$0xf]
    %v1014 = vld [vmem:[%s4] sm:$0x1]
    %v1016 = vlaneseq
    %v1017 = vshrl.u32 %v1016, 7
    %v1018 = vsub.s32 0, %v1017
    %v1019 = vrot.slane %v1014, %v1018
    %v1037 = vunpack.c.l.b16 %v998
    %v1038 = vunpack.c.l.b16 %v999
    %v1039 = vunpack.c.l.b16 %v1000
    %v1040 = vunpack.c.l.b16 %v1001
    %v1041 = vunpack.c.l.b16 %v1002
    %v1042 = vunpack.c.l.b16 %v1003
    %v1043 = vunpack.c.l.b16 %v1004
    %v1044 = vunpack.c.l.b16 %v1005
    %v1045 = vunpack.c.l.b16 %v1006
    %v1046 = vunpack.c.l.b16 %v1007
    %v1047 = vunpack.c.l.b16 %v1008
    %v1048 = vunpack.c.l.b16 %v1009
    %v1049 = vunpack.c.l.b16 %v1010
    %v1050 = vunpack.c.l.b16 %v1011
    %v1051 = vunpack.c.l.b16 %v1012
    %v1052 = vunpack.c.l.b16 %v1013
    %v1053 = vpack.c.b16 %v1038, %v1037
    %v1054 = vpack.c.b16 %v1040, %v1039
    %v1055 = vpack.c.b16 %v1042, %v1041
    %v1056 = vpack.c.b16 %v1044, %v1043
    %v1057 = vpack.c.b16 %v1046, %v1045
    %v1058 = vpack.c.b16 %v1048, %v1047
    %v1059 = vpack.c.b16 %v1050, %v1049
    %v1060 = vpack.c.b16 %v1052, %v1051
    %1069 = vmatprep.subr.bf16.mxu0 0
    %1070 = vmatpush1.bf16.msra.mxu0 %v1060
    %1071 = vmatprep.subr.bf16.mxu0 0
    %1072 = vmatpush1.bf16.msra.mxu0 %v1059
    %1073 = vmatprep.subr.bf16.mxu0 0
    %1074 = vmatpush1.bf16.msra.mxu0 %v1058
    %1075 = vmatprep.subr.bf16.mxu0 0
    %1076 = vmatpush1.bf16.msra.mxu0 %v1057
    %1077 = vmatprep.subr.bf16.mxu0 0
    %1078 = vmatpush1.bf16.msra.mxu0 %v1056
    %1079 = vmatprep.subr.bf16.mxu0 0
    %1080 = vmatpush1.bf16.msra.mxu0 %v1055
    %1081 = vmatprep.subr.bf16.mxu0 0
    %1082 = vmatpush1.bf16.msra.mxu0 %v1054
    %1083 = vmatprep.subr.bf16.mxu0 0
    %1084 = vmatpush1.bf16.msra.mxu0 %v1053
    %1085 = vmatprep.subr.bf16.mxu0 0
    %1086 = vmatpush2.bf16.msra.mxu0 0
    %1087 = vmatprep.subr.bf16.mxu0 0
    %1088 = vmatpush2.bf16.msra.mxu0 0
    %1089 = vmatprep.subr.bf16.mxu0 0
    %1090 = vmatpush2.bf16.msra.mxu0 0
    %1091 = vmatprep.subr.bf16.mxu0 0
    %1092 = vmatpush2.bf16.msra.mxu0 0
    %1093 = vmatprep.subr.bf16.mxu0 0
    %1094 = vmatpush2.bf16.msra.mxu0 0
    %1095 = vmatprep.subr.bf16.mxu0 0
    %1096 = vmatpush2.bf16.msra.mxu0 0
    %1097 = vmatprep.subr.bf16.mxu0 0
    %1098 = vmatpush2.bf16.msra.mxu0 0
    %1099 = vmatprep.subr.bf16.mxu0 0
    %1100 = vmatpush2.bf16.msra.mxu0 0
    %1101 = vmatprep.mubr.bf16.mxu0 0
    %1102 = vmatmul.mubr.bf16.gmra.mxu0 %v996
    %v1103 = vpop.f32.mrf.mxu0
    %v1104 = vadd.f32 %v1019, %v1103
    %v1105 = vpop.f32.mrf.mxu0
    %v1106 = vpop.f32.mrf.mxu0
    %v1107 = vadd.f32 %v1019, %v1106
    %v1108 = vpop.f32.mrf.mxu0
    %1109 = vmatprep.mubr.bf16.mxu0 0
    %1110 = vmatmul.mubr.bf16.gmra.mxu0 %v997
    %v1111 = vpop.f32.mrf.mxu0
    %v1112 = vadd.f32 %v1019, %v1111
    %v1113 = vpop.f32.mrf.mxu0
    %v1114 = vpop.f32.mrf.mxu0
    %v1115 = vadd.f32 %v1019, %v1114
    %v1116 = vpop.f32.mrf.mxu0
    %1117 = vdwg.mxu0
    %v1118 = vxor.u32 %v1104, 2147483648
    %v1119 = vxor.u32 %v1107, 2147483648
    %v1120 = vxor.u32 %v1112, 2147483648
    %v1121 = vxor.u32 %v1115, 2147483648
    %v1122 = vmul.f32 %v1118, 1.442695
    %v1123 = vpow.pop %v1122
    %v1124 = vmul.f32 %v1119, 1.442695
    %v1125 = vpow.pop %v1124
    %v1126 = vmul.f32 %v1120, 1.442695
    %v1127 = vpow.pop %v1126
    %v1128 = vmul.f32 %v1121, 1.442695
    %v1129 = vpow.pop %v1128
    %v1130 = vadd.f32 %v1123, 1.0
    %v1131 = vadd.f32 %v1125, 1.0
    %v1132 = vadd.f32 %v1127, 1.0
    %v1133 = vadd.f32 %v1129, 1.0
    %v1134 = vrcp.pop %v1130
    %v1135 = vmul.f32 1.0, %v1134
    %v1136 = vrcp.pop %v1131
    %v1137 = vmul.f32 1.0, %v1136
    %v1138 = vrcp.pop %v1132
    %v1139 = vmul.f32 1.0, %v1138
    %v1140 = vrcp.pop %v1133
    %v1141 = vmul.f32 1.0, %v1140
    %v1142 = vmul.f32 %v1104, %v1135
    %v1143 = vmul.f32 %v1107, %v1137
    %v1144 = vmul.f32 %v1112, %v1139
    %v1145 = vmul.f32 %v1115, %v1141
    %v1146 = vpack.c.bf16 %v1143, %v1142
    %v1147 = vpack.c.bf16 %v1145, %v1144
    %v1148 = vld [vmem:[%s5] sm:$0xf]
    %v1149 = vld [vmem:[%s5 + $0x4] sm:$0xf]
    %v1150 = vld [vmem:[%s5 + $0x8] sm:$0xf]
    %v1151 = vld [vmem:[%s5 + $0xc] sm:$0xf]
    %v1152 = vld [vmem:[%s5 + $0x10] sm:$0xf]
    %v1153 = vld [vmem:[%s5 + $0x14] sm:$0xf]
    %v1154 = vld [vmem:[%s5 + $0x18] sm:$0xf]
    %v1155 = vld [vmem:[%s5 + $0x1c] sm:$0xf]
    %v1156 = vld [vmem:[%s5 + $0x20] sm:$0xf]
    %v1157 = vld [vmem:[%s5 + $0x24] sm:$0xf]
    %v1158 = vld [vmem:[%s5 + $0x28] sm:$0xf]
    %v1159 = vld [vmem:[%s5 + $0x2c] sm:$0xf]
    %v1160 = vld [vmem:[%s5 + $0x30] sm:$0xf]
    %v1161 = vld [vmem:[%s5 + $0x34] sm:$0xf]
    %v1162 = vld [vmem:[%s5 + $0x38] sm:$0xf]
    %v1163 = vld [vmem:[%s5 + $0x3c] sm:$0xf]
    %v1164 = vld [vmem:[%s6] sm:$0x1]
    %v1166 = vlaneseq
    %v1167 = vshrl.u32 %v1166, 7
    %v1168 = vsub.s32 0, %v1167
    %v1169 = vrot.slane %v1164, %v1168
    %v1187 = vunpack.c.l.b16 %v1148
    %v1188 = vunpack.c.l.b16 %v1149
    %v1189 = vunpack.c.l.b16 %v1150
    %v1190 = vunpack.c.l.b16 %v1151
    %v1191 = vunpack.c.l.b16 %v1152
    %v1192 = vunpack.c.l.b16 %v1153
    %v1193 = vunpack.c.l.b16 %v1154
    %v1194 = vunpack.c.l.b16 %v1155
    %v1195 = vunpack.c.l.b16 %v1156
    %v1196 = vunpack.c.l.b16 %v1157
    %v1197 = vunpack.c.l.b16 %v1158
    %v1198 = vunpack.c.l.b16 %v1159
    %v1199 = vunpack.c.l.b16 %v1160
    %v1200 = vunpack.c.l.b16 %v1161
    %v1201 = vunpack.c.l.b16 %v1162
    %v1202 = vunpack.c.l.b16 %v1163
    %v1203 = vpack.c.b16 %v1188, %v1187
    %v1204 = vpack.c.b16 %v1190, %v1189
    %v1205 = vpack.c.b16 %v1192, %v1191
    %v1206 = vpack.c.b16 %v1194, %v1193
    %v1207 = vpack.c.b16 %v1196, %v1195
    %v1208 = vpack.c.b16 %v1198, %v1197
    %v1209 = vpack.c.b16 %v1200, %v1199
    %v1210 = vpack.c.b16 %v1202, %v1201
    %1219 = vmatprep.subr.bf16.mxu0 0
    %1220 = vmatpush1.bf16.msra.mxu0 %v1210
    %1221 = vmatprep.subr.bf16.mxu0 0
    %1222 = vmatpush1.bf16.msra.mxu0 %v1209
    %1223 = vmatprep.subr.bf16.mxu0 0
    %1224 = vmatpush1.bf16.msra.mxu0 %v1208
    %1225 = vmatprep.subr.bf16.mxu0 0
    %1226 = vmatpush1.bf16.msra.mxu0 %v1207
    %1227 = vmatprep.subr.bf16.mxu0 0
    %1228 = vmatpush1.bf16.msra.mxu0 %v1206
    %1229 = vmatprep.subr.bf16.mxu0 0
    %1230 = vmatpush1.bf16.msra.mxu0 %v1205
    %1231 = vmatprep.subr.bf16.mxu0 0
    %1232 = vmatpush1.bf16.msra.mxu0 %v1204
    %1233 = vmatprep.subr.bf16.mxu0 0
    %1234 = vmatpush1.bf16.msra.mxu0 %v1203
    %1235 = vmatprep.subr.bf16.mxu0 0
    %1236 = vmatpush2.bf16.msra.mxu0 0
    %1237 = vmatprep.subr.bf16.mxu0 0
    %1238 = vmatpush2.bf16.msra.mxu0 0
    %1239 = vmatprep.subr.bf16.mxu0 0
    %1240 = vmatpush2.bf16.msra.mxu0 0
    %1241 = vmatprep.subr.bf16.mxu0 0
    %1242 = vmatpush2.bf16.msra.mxu0 0
    %1243 = vmatprep.subr.bf16.mxu0 0
    %1244 = vmatpush2.bf16.msra.mxu0 0
    %1245 = vmatprep.subr.bf16.mxu0 0
    %1246 = vmatpush2.bf16.msra.mxu0 0
    %1247 = vmatprep.subr.bf16.mxu0 0
    %1248 = vmatpush2.bf16.msra.mxu0 0
    %1249 = vmatprep.subr.bf16.mxu0 0
    %1250 = vmatpush2.bf16.msra.mxu0 0
    %1251 = vmatprep.mubr.bf16.mxu0 0
    %1252 = vmatmul.mubr.bf16.gmra.mxu0 %v1146
    %v1253 = vpop.f32.mrf.mxu0
    %v1254 = vadd.f32 %v1169, %v1253
    %v1255 = vpop.f32.mrf.mxu0
    %v1256 = vpop.f32.mrf.mxu0
    %v1257 = vadd.f32 %v1169, %v1256
    %v1258 = vpop.f32.mrf.mxu0
    %1259 = vmatprep.mubr.bf16.mxu0 0
    %1260 = vmatmul.mubr.bf16.gmra.mxu0 %v1147
    %v1261 = vpop.f32.mrf.mxu0
    %v1262 = vadd.f32 %v1169, %v1261
    %v1263 = vpop.f32.mrf.mxu0
    %v1264 = vpop.f32.mrf.mxu0
    %v1265 = vadd.f32 %v1169, %v1264
    %v1266 = vpop.f32.mrf.mxu0
    %1267 = vdwg.mxu0
    %1268 = vst [vmem:[#allocation2] sm:$0xff] %v1254
    %1269 = vst [vmem:[#allocation2 + $0x8] sm:$0xff] %v1257
    %1270 = vst [vmem:[#allocation2 + $0x10] sm:$0xff] %v1262
    %1271 = vst [vmem:[#allocation2 + $0x18] sm:$0xff] %v1265
    // Predicated region
    $region30: #{cnn_embedder_forward.3} parent=1 // pred_check
      _
    $region31: #{cnn_embedder_forward.3} parent=1 // pred_check_branch
      %1273 = sbr.rel (0) target = $region33
    $region32: #{cnn_embedder_forward.3} parent=1 // pred_region
      %s1275 = ssub.s32 512, 512
      %1276 = vsyncadd [#allocation3], %s1275
      %s1277 = sshll.u32 [#allocation2], 4
      %s1278 = int_to_ptr.vmem [resolvable:$true] %s1277
      %1283 = dma.vmem_to_hbm [thread:$0]  %s1278, 512, %s7, [#allocation3], 128, 128, 8
    $region33: #{cnn_embedder_forward.3} parent=1 // pred_fallthru
      _
    // Predicated region
    $region34: #{cnn_embedder_forward.3} parent=1 // pred_check
      _
    $region35: #{cnn_embedder_forward.3} parent=1 // pred_check_branch
      %1285 = sbr.rel (0) target = $region37
    $region36: #{cnn_embedder_forward.3} parent=1 // pred_region
      %1286 = dma.done [#allocation3], 512
    $region37: #{cnn_embedder_forward.3} parent=1 // pred_fallthru
      _
    %1287 = vsyncpa [#allocation3], 1

</llo_original>
